<compile_context>
chip_gen: v6e
topology: v6e:2x2x1
jax: 0.10.0
libtpu: 0.0.40
codegen_flags: <defaults>
</compile_context>

<pallas_src>
import jax
import jax.numpy as jnp
from jax.experimental import pallas as pl
from jax.experimental.pallas import tpu as pltpu


# ----------------------------------------------------------------------------
# Fused Pallas kernel
# ----------------------------------------------------------------------------

def _linear_self_attn_kernel(x_ref, wq_ref, wk_ref, bk_ref, wv_ref, bv_ref,
                             wo_ref, bo_ref, o_ref):
    # x_ref : (Tm, N, C)  tile of B*patch_area token rows, channels-last
    # wq_ref: (1, C) f32
    # wk_ref/wv_ref/wo_ref: (C, C) bf16        bk/bv/bo: (1, C) f32
    # o_ref : (Tm, N, C)
    Tm, N, C = x_ref.shape
    x = x_ref[...]
    x_mx = x.astype(jnp.bfloat16)        # MXU operands (bf16 fast path on all gens)
    x_f32 = x.astype(jnp.float32)        # VPU query path; no-op when input is f32

    # --- query (1-output-channel 1x1 conv) + softmax over patches N.
    # Kept in (Tm, N, 1) keepdims layout so only sublane reductions and lane
    # splats are needed (no lane<->sublane relayouts).  The query bias is a
    # softmax shift-invariant no-op and is omitted.
    q = jnp.sum(x_f32 * wq_ref[...].reshape(1, 1, C), axis=-1, keepdims=True)  # (Tm,N,1)
    q = q - jnp.max(q, axis=1, keepdims=True)
    e = jnp.exp(q)
    denom = jnp.sum(e, axis=1, keepdims=True)                                  # (Tm,1,1)
    scores = e * pl.reciprocal(denom, approx=True)   # EUP slot; ~1e-3 rel err  (Tm,N,1)

    x2 = x_mx.reshape(Tm * N, C)

    # --- key projection -> context vector (k is dead before v is computed,
    # --- halving the widest live f32 intermediate).
    k = (jnp.dot(x2, wk_ref[...], preferred_element_type=jnp.float32)
         + bk_ref[...]).reshape(Tm, N, C)                                      # f32
    ctx = jnp.sum(k * scores, axis=1, keepdims=True)                           # (Tm,1,C)

    # --- value projection, ReLU gate, output projection.
    v = (jnp.dot(x2, wv_ref[...], preferred_element_type=jnp.float32)
         + bv_ref[...]).reshape(Tm, N, C)
    gated = jnp.maximum(v, 0.0) * ctx                                          # (Tm,N,C) f32
    out = jnp.dot(gated.reshape(Tm * N, C).astype(jnp.bfloat16), wo_ref[...],
                  preferred_element_type=jnp.float32) + bo_ref[...]            # (Tm*N,C)
    o_ref[...] = out.reshape(Tm, N, C).astype(o_ref.dtype)


# ----------------------------------------------------------------------------
# Tiling / VMEM heuristics
# ----------------------------------------------------------------------------

def _vmem_limit_bytes() -> int:
    """Scoped VMEM limit with headroom below physical (64 MiB/TC on v7x,
    128 MiB on v5e/v6e)."""
    try:
        phys = int(pltpu.get_tpu_info().vmem_capacity_bytes)
    except Exception:
        phys = 64 << 20  # conservative fallback (v7x per-core VMEM)
    return min(phys - (8 << 20), 96 << 20)


def _choose_tile_m(M: int, N: int, C: int, vmem_limit_bytes: int) -> int:
    # Working-set model: double-buffered x + out tiles plus ~3 tiles worth of
    # f32 intermediates (k/ctx or v/gated live at once) ~= 7 * tile*N*C*4 B.
    # Largest divisor of M that fits ~60% of the scoped limit; small M -> one
    # grid step (no per-step overhead), production M -> many pipelined steps.
    row_bytes = 7 * N * C * 4
    budget_rows = max(1, int(vmem_limit_bytes * 0.6) // row_bytes)
    tile = 1
    for d in range(1, M + 1):
        if M % d == 0 and d <= budget_rows:
            tile = d
    return tile


# ----------------------------------------------------------------------------
# Wrappers
# ----------------------------------------------------------------------------

def dcs_linear_self_attention(x, params, *, tile_m=None):
    """Fused linear self-attention, channels-last layout (primary entry point).

    x: (..., num_patches, embed_dim); leading dims (batch, patch_area, ...)
    are flattened into the tiled token-row axis.  Keeping the surrounding
    model channels-last avoids any HBM transpose around this kernel.
    """
    *lead, N, C = x.shape
    M = 1
    for d in lead:
        M *= d
    xm = x.reshape(M, N, C)

    vmem_limit = _vmem_limit_bytes()
    if tile_m is None:
        tile_m = _choose_tile_m(M, N, C, vmem_limit)
    assert M % tile_m == 0, (M, tile_m)

    # bf16 operands for the MXU matmuls (cast once here; a real model would
    # simply store them in bf16).  Query weight / biases stay f32 (VPU path).
    wq = params['wq'].astype(jnp.float32)
    wk = params['wk'].astype(jnp.bfloat16)
    wv = params['wv'].astype(jnp.bfloat16)
    wo = params['wo'].astype(jnp.bfloat16)
    bk = params['bk'].astype(jnp.float32)
    bv = params['bv'].astype(jnp.float32)
    bo = params['bo'].astype(jnp.float32)

    const2 = lambda m: (0, 0)
    out = pl.pallas_call(
        _linear_self_attn_kernel,
        out_shape=jax.ShapeDtypeStruct((M, N, C), x.dtype),
        grid=(M // tile_m,),
        in_specs=[
            pl.BlockSpec((tile_m, N, C), lambda m: (m, 0, 0)),
            pl.BlockSpec((1, C), const2),
            pl.BlockSpec((C, C), const2),
            pl.BlockSpec((1, C), const2),
            pl.BlockSpec((C, C), const2),
            pl.BlockSpec((1, C), const2),
            pl.BlockSpec((C, C), const2),
            pl.BlockSpec((1, C), const2),
        ],
        out_specs=pl.BlockSpec((tile_m, N, C), lambda m: (m, 0, 0)),
        compiler_params=pltpu.CompilerParams(
            dimension_semantics=("parallel",),
            vmem_limit_bytes=vmem_limit),
    )(xm, wq, wk, bk, wv, bv, wo, bo)

    return out.reshape(*lead, N, C)


def dcs_linear_self_attention_bcpn(x_bcpn, params, *, tile_m=None):
    """PyTorch-layout compatibility entry: x (B, embed_dim, patch_area, num_patches).

    The two transposes here are pure layout plumbing (one full HBM pass each);
    a surrounding model should stay channels-last and call
    dcs_linear_self_attention directly.
    """
    B, C, P, N = x_bcpn.shape
    x = jnp.transpose(x_bcpn, (0, 2, 3, 1))              # (B, P, N, C)
    out = dcs_linear_self_attention(x, params, tile_m=tile_m)
    return jnp.transpose(out, (0, 3, 1, 2))              # back to (B, C, P, N)


# ----------------------------------------------------------------------------
# Pure-JAX reference (faithful to the PyTorch module) and parameter init
# ----------------------------------------------------------------------------

def _reference_channels_last(x, params):
    # x: (..., N, C).  Includes the query bias (shift-invariant under softmax).
    q = jnp.einsum('...nc,c->...n', x, params['wq'][0]) + params['bq'][0, 0]
    scores = jax.nn.softmax(q, axis=-1)[..., None]
    k = jnp.einsum('...nc,cd->...nd', x, params['wk']) + params['bk'][0]
    v = jnp.einsum('...nc,cd->...nd', x, params['wv']) + params['bv'][0]
    ctx = jnp.sum(k * scores, axis=-2, keepdims=True)
    gated = jax.nn.relu(v) * ctx
    return jnp.einsum('...nc,cd->...nd', gated, params['wo']) + params['bo'][0]


def init_params(key, *, embed_dim, scale=0.1):
    """Weight layout (already transposed from the PyTorch 1x1 convs):
      wq (1, C)   = qkv_proj.weight[0:1, :, 0, 0]
      bq (1, 1)   = qkv_proj.bias[0:1]         (softmax-invariant; kernel omits it)
      wk (C, C)   = qkv_proj.weight[1:1+C, :, 0, 0].T   bk = qkv_proj.bias[1:1+C]
      wv (C, C)   = qkv_proj.weight[1+C:, :, 0, 0].T    bv = qkv_proj.bias[1+C:]
      wo (C, C)   = out_proj.weight[:, :, 0, 0].T       bo = out_proj.bias
    """
    ks = jax.random.split(key, 8)
    n = lambda k, s: jax.random.normal(k, s, jnp.float32) * scale
    return dict(
        wq=n(ks[0], (1, embed_dim)), bq=n(ks[1], (1, 1)),
        wk=n(ks[2], (embed_dim, embed_dim)), bk=n(ks[3], (1, embed_dim)),
        wv=n(ks[4], (embed_dim, embed_dim)), bv=n(ks[5], (1, embed_dim)),
        wo=n(ks[6], (embed_dim, embed_dim)), bo=n(ks[7], (1, embed_dim)),
    )


if __name__ == "__main__":
    # embed_dim=128 keeps the C axis lane-dense; patch_area=4 matches the
    # MobileViT-v2 2x2 patching this attention is used with.
    B, C, P, N = 2, 128, 4, 64

    key = jax.random.PRNGKey(0)
    kx, kw = jax.random.split(key)
    params = init_params(kw, embed_dim=C)

    # --- primary channels-last path: no wrapper transposes ---
    x_nhwc = jax.random.normal(kx, (B, P, N, C), jnp.float32)
    out = jax.block_until_ready(jax.jit(dcs_linear_self_attention)(x_nhwc, params))
    assert out.shape == (B, P, N, C), out.shape
    assert bool(jnp.all(jnp.isfinite(out)))
    ref = _reference_channels_last(x_nhwc, params)
    # bf16 MXU operands (vs. the f32 reference) loosen agreement slightly.
    assert bool(jnp.allclose(out, ref, rtol=2e-2, atol=2e-2)), \
        float(jnp.max(jnp.abs(out - ref)))

    # --- PyTorch-layout compatibility path (B, C, P, N) ---
    x_bcpn = jnp.transpose(x_nhwc, (0, 3, 1, 2))
    out_bcpn = jax.block_until_ready(
        jax.jit(dcs_linear_self_attention_bcpn)(x_bcpn, params))
    ref_bcpn = jnp.transpose(ref, (0, 3, 1, 2))
    assert out_bcpn.shape == (B, C, P, N), out_bcpn.shape
    assert bool(jnp.allclose(out_bcpn, ref_bcpn, rtol=2e-2, atol=2e-2)), \
        float(jnp.max(jnp.abs(out_bcpn - ref_bcpn)))

    print("KERNEL_OK")
</pallas_src>

<mosaic_0001>
module attributes {stable_mosaic.version = 11 : i64} {
  func.func @_linear_self_attn_kernel(%arg0: i32, %arg1: memref<8x64x128xf32, #tpu.memory_space<vmem>>, %arg2: memref<1x128xf32, #tpu.memory_space<vmem>>, %arg3: memref<128x128xbf16, #tpu.memory_space<vmem>>, %arg4: memref<1x128xf32, #tpu.memory_space<vmem>>, %arg5: memref<128x128xbf16, #tpu.memory_space<vmem>>, %arg6: memref<1x128xf32, #tpu.memory_space<vmem>>, %arg7: memref<128x128xbf16, #tpu.memory_space<vmem>>, %arg8: memref<1x128xf32, #tpu.memory_space<vmem>>, %arg9: memref<8x64x128xf32, #tpu.memory_space<vmem>>) attributes {dimension_semantics = [#tpu.dimension_semantics<parallel>], iteration_bounds = array<i64: 1>, scalar_prefetch = 0 : i64, scratch_operands = 0 : i64, tpu.core_type = #tpu.core_type<tc>, window_params = [{transform_indices = @transform_0, window_bounds = array<i64: 8, 64, 128>}, {pipeline_mode = #tpu.pipeline_mode<synchronous>, transform_indices = @transform_1, window_bounds = array<i64: 1, 128>}, {pipeline_mode = #tpu.pipeline_mode<synchronous>, transform_indices = @transform_2, window_bounds = array<i64: 128, 128>}, {pipeline_mode = #tpu.pipeline_mode<synchronous>, transform_indices = @transform_3, window_bounds = array<i64: 1, 128>}, {pipeline_mode = #tpu.pipeline_mode<synchronous>, transform_indices = @transform_4, window_bounds = array<i64: 128, 128>}, {pipeline_mode = #tpu.pipeline_mode<synchronous>, transform_indices = @transform_5, window_bounds = array<i64: 1, 128>}, {pipeline_mode = #tpu.pipeline_mode<synchronous>, transform_indices = @transform_6, window_bounds = array<i64: 128, 128>}, {pipeline_mode = #tpu.pipeline_mode<synchronous>, transform_indices = @transform_7, window_bounds = array<i64: 1, 128>}, {transform_indices = @transform_8, window_bounds = array<i64: 8, 64, 128>}]} {
    %c0 = arith.constant 0 : index
    %c0_0 = arith.constant 0 : index
    %c0_1 = arith.constant 0 : index
    %0 = vector.load %arg1[%c0, %c0_0, %c0_1] : memref<8x64x128xf32, #tpu.memory_space<vmem>>, vector<8x64x128xf32>
    %1 = arith.truncf %0 : vector<8x64x128xf32> to vector<8x64x128xbf16>
    %c0_2 = arith.constant 0 : index
    %c0_3 = arith.constant 0 : index
    %2 = vector.load %arg2[%c0_2, %c0_3] : memref<1x128xf32, #tpu.memory_space<vmem>>, vector<1x128xf32>
    %3 = vector.shape_cast %2 : vector<1x128xf32> to vector<1x1x128xf32>
    %4 = vector.broadcast %3 : vector<1x1x128xf32> to vector<8x64x128xf32>
    %5 = arith.mulf %0, %4 : vector<8x64x128xf32>
    %cst = arith.constant dense<0.000000e+00> : vector<8x64xf32>
    %6 = vector.multi_reduction <add>, %5, %cst [2] : vector<8x64x128xf32> to vector<8x64xf32>
    %7 = vector.shape_cast %6 : vector<8x64xf32> to vector<8x64x1xf32>
    %cst_4 = arith.constant dense<0xFF800000> : vector<8x1xf32>
    %8 = vector.multi_reduction <maximumf>, %7, %cst_4 [1] : vector<8x64x1xf32> to vector<8x1xf32>
    %9 = vector.shape_cast %8 : vector<8x1xf32> to vector<8x1x1xf32>
    %10 = vector.broadcast %9 : vector<8x1x1xf32> to vector<8x64x1xf32>
    %11 = arith.subf %7, %10 : vector<8x64x1xf32>
    %12 = math.exp %11 : vector<8x64x1xf32>
    %cst_5 = arith.constant dense<0.000000e+00> : vector<8x1xf32>
    %13 = vector.multi_reduction <add>, %12, %cst_5 [1] : vector<8x64x1xf32> to vector<8x1xf32>
    %14 = vector.shape_cast %13 : vector<8x1xf32> to vector<8x1x1xf32>
    %15 = tpu.reciprocal %14 {approx = true} : vector<8x1x1xf32> -> vector<8x1x1xf32>
    %16 = vector.broadcast %15 : vector<8x1x1xf32> to vector<8x64x1xf32>
    %17 = arith.mulf %12, %16 : vector<8x64x1xf32>
    %18 = vector.shape_cast %1 : vector<8x64x128xbf16> to vector<512x128xbf16>
    %c0_6 = arith.constant 0 : index
    %c0_7 = arith.constant 0 : index
    %19 = vector.load %arg3[%c0_6, %c0_7] : memref<128x128xbf16, #tpu.memory_space<vmem>>, vector<128x128xbf16>
    %cst_8 = arith.constant dense<0.000000e+00> : vector<512x128xf32>
    %20 = tpu.matmul %18, %19, %cst_8 {dimension_numbers = #tpu.dot_dimension_numbers<[1], [0], [0], [1], [0, 0, 1, 1], [], []>} : vector<512x128xbf16>, vector<128x128xbf16>, vector<512x128xf32> -> vector<512x128xf32>
    %c0_9 = arith.constant 0 : index
    %c0_10 = arith.constant 0 : index
    %21 = vector.load %arg4[%c0_9, %c0_10] : memref<1x128xf32, #tpu.memory_space<vmem>>, vector<1x128xf32>
    %22 = vector.broadcast %21 : vector<1x128xf32> to vector<512x128xf32>
    %23 = arith.addf %20, %22 : vector<512x128xf32>
    %24 = vector.shape_cast %23 : vector<512x128xf32> to vector<8x64x128xf32>
    %25 = vector.broadcast %17 : vector<8x64x1xf32> to vector<8x64x128xf32>
    %26 = arith.mulf %24, %25 : vector<8x64x128xf32>
    %cst_11 = arith.constant dense<0.000000e+00> : vector<8x128xf32>
    %27 = vector.multi_reduction <add>, %26, %cst_11 [1] : vector<8x64x128xf32> to vector<8x128xf32>
    %28 = vector.shape_cast %27 : vector<8x128xf32> to vector<8x1x128xf32>
    %c0_12 = arith.constant 0 : index
    %c0_13 = arith.constant 0 : index
    %29 = vector.load %arg5[%c0_12, %c0_13] : memref<128x128xbf16, #tpu.memory_space<vmem>>, vector<128x128xbf16>
    %cst_14 = arith.constant dense<0.000000e+00> : vector<512x128xf32>
    %30 = tpu.matmul %18, %29, %cst_14 {dimension_numbers = #tpu.dot_dimension_numbers<[1], [0], [0], [1], [0, 0, 1, 1], [], []>} : vector<512x128xbf16>, vector<128x128xbf16>, vector<512x128xf32> -> vector<512x128xf32>
    %c0_15 = arith.constant 0 : index
    %c0_16 = arith.constant 0 : index
    %31 = vector.load %arg6[%c0_15, %c0_16] : memref<1x128xf32, #tpu.memory_space<vmem>>, vector<1x128xf32>
    %32 = vector.broadcast %31 : vector<1x128xf32> to vector<512x128xf32>
    %33 = arith.addf %30, %32 : vector<512x128xf32>
    %34 = vector.shape_cast %33 : vector<512x128xf32> to vector<8x64x128xf32>
    %cst_17 = arith.constant 0.000000e+00 : f32
    %35 = vector.broadcast %cst_17 : f32 to vector<8x64x128xf32>
    %36 = arith.maximumf %34, %35 : vector<8x64x128xf32>
    %37 = vector.broadcast %28 : vector<8x1x128xf32> to vector<8x64x128xf32>
    %38 = arith.mulf %36, %37 : vector<8x64x128xf32>
    %39 = vector.shape_cast %38 : vector<8x64x128xf32> to vector<512x128xf32>
    %40 = arith.truncf %39 : vector<512x128xf32> to vector<512x128xbf16>
    %c0_18 = arith.constant 0 : index
    %c0_19 = arith.constant 0 : index
    %41 = vector.load %arg7[%c0_18, %c0_19] : memref<128x128xbf16, #tpu.memory_space<vmem>>, vector<128x128xbf16>
    %cst_20 = arith.constant dense<0.000000e+00> : vector<512x128xf32>
    %42 = tpu.matmul %40, %41, %cst_20 {dimension_numbers = #tpu.dot_dimension_numbers<[1], [0], [0], [1], [0, 0, 1, 1], [], []>} : vector<512x128xbf16>, vector<128x128xbf16>, vector<512x128xf32> -> vector<512x128xf32>
    %c0_21 = arith.constant 0 : index
    %c0_22 = arith.constant 0 : index
    %43 = vector.load %arg8[%c0_21, %c0_22] : memref<1x128xf32, #tpu.memory_space<vmem>>, vector<1x128xf32>
    %44 = vector.broadcast %43 : vector<1x128xf32> to vector<512x128xf32>
    %45 = arith.addf %42, %44 : vector<512x128xf32>
    %46 = vector.shape_cast %45 : vector<512x128xf32> to vector<8x64x128xf32>
    %c0_23 = arith.constant 0 : index
    %c0_24 = arith.constant 0 : index
    %c0_25 = arith.constant 0 : index
    %47 = vector.load %arg9[%c0_23, %c0_24, %c0_25] : memref<8x64x128xf32, #tpu.memory_space<vmem>>, vector<8x64x128xf32>
    tpu.vector_store %arg9[%c0_23, %c0_24, %c0_25], %46 {strides = array<i32>} : memref<8x64x128xf32, #tpu.memory_space<vmem>>, vector<8x64x128xf32>,
    return
  }
  func.func @transform_0(%arg0: i32) -> (i32, i32, i32) {
    %c0_i32 = arith.constant 0 : i32
    %c0_i32_0 = arith.constant 0 : i32
    %c0_i32_1 = arith.constant 0 : i32
    return %arg0, %c0_i32, %c0_i32_0 : i32, i32, i32
  }
  func.func @transform_1(%arg0: i32) -> (i32, i32) {
    %c0_i32 = arith.constant 0 : i32
    %c0_i32_0 = arith.constant 0 : i32
    %c0_i32_1 = arith.constant 0 : i32
    return %c0_i32, %c0_i32_0 : i32, i32
  }
  func.func @transform_2(%arg0: i32) -> (i32, i32) {
    %c0_i32 = arith.constant 0 : i32
    %c0_i32_0 = arith.constant 0 : i32
    %c0_i32_1 = arith.constant 0 : i32
    return %c0_i32, %c0_i32_0 : i32, i32
  }
  func.func @transform_3(%arg0: i32) -> (i32, i32) {
    %c0_i32 = arith.constant 0 : i32
    %c0_i32_0 = arith.constant 0 : i32
    %c0_i32_1 = arith.constant 0 : i32
    return %c0_i32, %c0_i32_0 : i32, i32
  }
  func.func @transform_4(%arg0: i32) -> (i32, i32) {
    %c0_i32 = arith.constant 0 : i32
    %c0_i32_0 = arith.constant 0 : i32
    %c0_i32_1 = arith.constant 0 : i32
    return %c0_i32, %c0_i32_0 : i32, i32
  }
  func.func @transform_5(%arg0: i32) -> (i32, i32) {
    %c0_i32 = arith.constant 0 : i32
    %c0_i32_0 = arith.constant 0 : i32
    %c0_i32_1 = arith.constant 0 : i32
    return %c0_i32, %c0_i32_0 : i32, i32
  }
  func.func @transform_6(%arg0: i32) -> (i32, i32) {
    %c0_i32 = arith.constant 0 : i32
    %c0_i32_0 = arith.constant 0 : i32
    %c0_i32_1 = arith.constant 0 : i32
    return %c0_i32, %c0_i32_0 : i32, i32
  }
  func.func @transform_7(%arg0: i32) -> (i32, i32) {
    %c0_i32 = arith.constant 0 : i32
    %c0_i32_0 = arith.constant 0 : i32
    %c0_i32_1 = arith.constant 0 : i32
    return %c0_i32, %c0_i32_0 : i32, i32
  }
  func.func @transform_8(%arg0: i32) -> (i32, i32, i32) {
    %c0_i32 = arith.constant 0 : i32
    %c0_i32_0 = arith.constant 0 : i32
    %c0_i32_1 = arith.constant 0 : i32
    return %arg0, %c0_i32, %c0_i32_0 : i32, i32, i32
  }
}

</mosaic_0001>

<llo_original>
// kernel: dcs_linear_self_attention.1
$region0: #{dcs_linear_self_attention.1}
  #allocation0 [shape = 'u32[]', space=smem, size = 0x4, offset = 0x4, fixed_abs, tag = 'smem constant byte address 0x4 - core index']
  #allocation1 [shape = 'u32[144,128]{1,0:T(1,128)}', space=vmem, size = 0x12000, scoped, tag = 'internal scratch']
  %s0 = inlined_call_operand.vmem [shape: f32[8,64,128], index: 0, kind: input, shape index: {}]
  %s1 = inlined_call_operand.vmem [shape: f32[1,128], index: 1, kind: input, shape index: {}]
  %s2 = inlined_call_operand.vmem [shape: bf16[128,128], index: 2, kind: input, shape index: {}]
  %s3 = inlined_call_operand.vmem [shape: f32[1,128], index: 3, kind: input, shape index: {}]
  %s4 = inlined_call_operand.vmem [shape: bf16[128,128], index: 4, kind: input, shape index: {}]
  %s5 = inlined_call_operand.vmem [shape: f32[1,128], index: 5, kind: input, shape index: {}]
  %s6 = inlined_call_operand.vmem [shape: bf16[128,128], index: 6, kind: input, shape index: {}]
  %s7 = inlined_call_operand.vmem [shape: f32[1,128], index: 7, kind: input, shape index: {}]
  %s8 = inlined_call_operand.hbm [shape: f32[8,64,128], index: 8, kind: output, shape index: {}]
  %s9 = sld [smem:[#allocation0]]
  $region42: #{dcs_linear_self_attention.1} parent=0
    _
  %s11 = ssub.s32 1, %s9
  %s12 = scalar_select 0, %s11, %s9
  $region1: #{dcs_linear_self_attention.1} parent=0
    #allocation2 [shape = 'u8[262144]{0}', space=vmem, size = 0x40000, scoped, tag = 'output window, operand 0, single buffered']
    #allocation3 [shape = 's32[1]{0}', space=sflag, size = 0x4, scoped, tag = 'scoped memory for dcs_linear_self_attention.1']
    %13 = vsyncpa [#allocation3], 0
    // Predicated region
    $region2: #{dcs_linear_self_attention.1} parent=1 // pred_check
      _
    $region3: #{dcs_linear_self_attention.1} parent=1 // pred_check_branch
      %15 = sbr.rel (0) target = $region5
    $region4: #{dcs_linear_self_attention.1} parent=1 // pred_region
      _
    $region5: #{dcs_linear_self_attention.1} parent=1 // pred_fallthru
      _
    // Predicated region
    $region6: #{dcs_linear_self_attention.1} parent=1 // pred_check
      _
    $region7: #{dcs_linear_self_attention.1} parent=1 // pred_check_branch
      %17 = sbr.rel (0) target = $region9
    $region8: #{dcs_linear_self_attention.1} parent=1 // pred_region
      _
    $region9: #{dcs_linear_self_attention.1} parent=1 // pred_fallthru
      _
    // Predicated region
    $region10: #{dcs_linear_self_attention.1} parent=1 // pred_check
      _
    $region11: #{dcs_linear_self_attention.1} parent=1 // pred_check_branch
      %19 = sbr.rel (0) target = $region13
    $region12: #{dcs_linear_self_attention.1} parent=1 // pred_region
      _
    $region13: #{dcs_linear_self_attention.1} parent=1 // pred_fallthru
      _
    // Predicated region
    $region14: #{dcs_linear_self_attention.1} parent=1 // pred_check
      _
    $region15: #{dcs_linear_self_attention.1} parent=1 // pred_check_branch
      %21 = sbr.rel (0) target = $region17
    $region16: #{dcs_linear_self_attention.1} parent=1 // pred_region
      _
    $region17: #{dcs_linear_self_attention.1} parent=1 // pred_fallthru
      _
    // Predicated region
    $region18: #{dcs_linear_self_attention.1} parent=1 // pred_check
      _
    $region19: #{dcs_linear_self_attention.1} parent=1 // pred_check_branch
      %23 = sbr.rel (0) target = $region21
    $region20: #{dcs_linear_self_attention.1} parent=1 // pred_region
      _
    $region21: #{dcs_linear_self_attention.1} parent=1 // pred_fallthru
      _
    // Predicated region
    $region22: #{dcs_linear_self_attention.1} parent=1 // pred_check
      _
    $region23: #{dcs_linear_self_attention.1} parent=1 // pred_check_branch
      %25 = sbr.rel (0) target = $region25
    $region24: #{dcs_linear_self_attention.1} parent=1 // pred_region
      _
    $region25: #{dcs_linear_self_attention.1} parent=1 // pred_fallthru
      _
    // Predicated region
    $region26: #{dcs_linear_self_attention.1} parent=1 // pred_check
      _
    $region27: #{dcs_linear_self_attention.1} parent=1 // pred_check_branch
      %27 = sbr.rel (0) target = $region29
    $region28: #{dcs_linear_self_attention.1} parent=1 // pred_region
      _
    $region29: #{dcs_linear_self_attention.1} parent=1 // pred_fallthru
      _
    // Predicated region
    $region30: #{dcs_linear_self_attention.1} parent=1 // pred_check
      _
    $region31: #{dcs_linear_self_attention.1} parent=1 // pred_check_branch
      %29 = sbr.rel (0) target = $region33
    $region32: #{dcs_linear_self_attention.1} parent=1 // pred_region
      _
    $region33: #{dcs_linear_self_attention.1} parent=1 // pred_fallthru
      _
    %v31 = vld [vmem:[%s0] sm:$0xff]
    %v32 = vld [vmem:[%s0 + $0x8] sm:$0xff]
    %v33 = vld [vmem:[%s0 + $0x10] sm:$0xff]
    %v34 = vld [vmem:[%s0 + $0x18] sm:$0xff]
    %v35 = vld [vmem:[%s0 + $0x20] sm:$0xff]
    %v36 = vld [vmem:[%s0 + $0x28] sm:$0xff]
    %v37 = vld [vmem:[%s0 + $0x30] sm:$0xff]
    %v38 = vld [vmem:[%s0 + $0x38] sm:$0xff]
    %v39 = vld [vmem:[%s0 + $0x40] sm:$0xff]
    %v40 = vld [vmem:[%s0 + $0x48] sm:$0xff]
    %v41 = vld [vmem:[%s0 + $0x50] sm:$0xff]
    %v42 = vld [vmem:[%s0 + $0x58] sm:$0xff]
    %v43 = vld [vmem:[%s0 + $0x60] sm:$0xff]
    %v44 = vld [vmem:[%s0 + $0x68] sm:$0xff]
    %v45 = vld [vmem:[%s0 + $0x70] sm:$0xff]
    %v46 = vld [vmem:[%s0 + $0x78] sm:$0xff]
    %v47 = vld [vmem:[%s0 + $0x80] sm:$0xff]
    %v48 = vld [vmem:[%s0 + $0x88] sm:$0xff]
    %v49 = vld [vmem:[%s0 + $0x90] sm:$0xff]
    %v50 = vld [vmem:[%s0 + $0x98] sm:$0xff]
    %v51 = vld [vmem:[%s0 + $0xa0] sm:$0xff]
    %v52 = vld [vmem:[%s0 + $0xa8] sm:$0xff]
    %v53 = vld [vmem:[%s0 + $0xb0] sm:$0xff]
    %v54 = vld [vmem:[%s0 + $0xb8] sm:$0xff]
    %v55 = vld [vmem:[%s0 + $0xc0] sm:$0xff]
    %v56 = vld [vmem:[%s0 + $0xc8] sm:$0xff]
    %v57 = vld [vmem:[%s0 + $0xd0] sm:$0xff]
    %v58 = vld [vmem:[%s0 + $0xd8] sm:$0xff]
    %v59 = vld [vmem:[%s0 + $0xe0] sm:$0xff]
    %v60 = vld [vmem:[%s0 + $0xe8] sm:$0xff]
    %v61 = vld [vmem:[%s0 + $0xf0] sm:$0xff]
    %v62 = vld [vmem:[%s0 + $0xf8] sm:$0xff]
    %v63 = vld [vmem:[%s0 + $0x100] sm:$0xff]
    %v64 = vld [vmem:[%s0 + $0x108] sm:$0xff]
    %v65 = vld [vmem:[%s0 + $0x110] sm:$0xff]
    %v66 = vld [vmem:[%s0 + $0x118] sm:$0xff]
    %v67 = vld [vmem:[%s0 + $0x120] sm:$0xff]
    %v68 = vld [vmem:[%s0 + $0x128] sm:$0xff]
    %v69 = vld [vmem:[%s0 + $0x130] sm:$0xff]
    %v70 = vld [vmem:[%s0 + $0x138] sm:$0xff]
    %v71 = vld [vmem:[%s0 + $0x140] sm:$0xff]
    %v72 = vld [vmem:[%s0 + $0x148] sm:$0xff]
    %v73 = vld [vmem:[%s0 + $0x150] sm:$0xff]
    %v74 = vld [vmem:[%s0 + $0x158] sm:$0xff]
    %v75 = vld [vmem:[%s0 + $0x160] sm:$0xff]
    %v76 = vld [vmem:[%s0 + $0x168] sm:$0xff]
    %v77 = vld [vmem:[%s0 + $0x170] sm:$0xff]
    %v78 = vld [vmem:[%s0 + $0x178] sm:$0xff]
    %v79 = vld [vmem:[%s0 + $0x180] sm:$0xff]
    %v80 = vld [vmem:[%s0 + $0x188] sm:$0xff]
    %v81 = vld [vmem:[%s0 + $0x190] sm:$0xff]
    %v82 = vld [vmem:[%s0 + $0x198] sm:$0xff]
    %v83 = vld [vmem:[%s0 + $0x1a0] sm:$0xff]
    %v84 = vld [vmem:[%s0 + $0x1a8] sm:$0xff]
    %v85 = vld [vmem:[%s0 + $0x1b0] sm:$0xff]
    %v86 = vld [vmem:[%s0 + $0x1b8] sm:$0xff]
    %v87 = vld [vmem:[%s0 + $0x1c0] sm:$0xff]
    %v88 = vld [vmem:[%s0 + $0x1c8] sm:$0xff]
    %v89 = vld [vmem:[%s0 + $0x1d0] sm:$0xff]
    %v90 = vld [vmem:[%s0 + $0x1d8] sm:$0xff]
    %v91 = vld [vmem:[%s0 + $0x1e0] sm:$0xff]
    %v92 = vld [vmem:[%s0 + $0x1e8] sm:$0xff]
    %v93 = vld [vmem:[%s0 + $0x1f0] sm:$0xff]
    %v94 = vld [vmem:[%s0 + $0x1f8] sm:$0xff]
    %v95 = vpack.c.bf16 %v32, %v31
    %v96 = vpack.c.bf16 %v34, %v33
    %v97 = vpack.c.bf16 %v36, %v35
    %v98 = vpack.c.bf16 %v38, %v37
    %v99 = vpack.c.bf16 %v40, %v39
    %v100 = vpack.c.bf16 %v42, %v41
    %v101 = vpack.c.bf16 %v44, %v43
    %v102 = vpack.c.bf16 %v46, %v45
    %v103 = vpack.c.bf16 %v48, %v47
    %v104 = vpack.c.bf16 %v50, %v49
    %v105 = vpack.c.bf16 %v52, %v51
    %v106 = vpack.c.bf16 %v54, %v53
    %v107 = vpack.c.bf16 %v56, %v55
    %v108 = vpack.c.bf16 %v58, %v57
    %v109 = vpack.c.bf16 %v60, %v59
    %v110 = vpack.c.bf16 %v62, %v61
    %v111 = vpack.c.bf16 %v64, %v63
    %v112 = vpack.c.bf16 %v66, %v65
    %v113 = vpack.c.bf16 %v68, %v67
    %v114 = vpack.c.bf16 %v70, %v69
    %v115 = vpack.c.bf16 %v72, %v71
    %v116 = vpack.c.bf16 %v74, %v73
    %v117 = vpack.c.bf16 %v76, %v75
    %v118 = vpack.c.bf16 %v78, %v77
    %v119 = vpack.c.bf16 %v80, %v79
    %v120 = vpack.c.bf16 %v82, %v81
    %v121 = vpack.c.bf16 %v84, %v83
    %v122 = vpack.c.bf16 %v86, %v85
    %v123 = vpack.c.bf16 %v88, %v87
    %v124 = vpack.c.bf16 %v90, %v89
    %v125 = vpack.c.bf16 %v92, %v91
    %v126 = vpack.c.bf16 %v94, %v93
    %v127 = vld [vmem:[%s1] sm:$0x1]
    %v129 = vlaneseq
    %v130 = vshrl.u32 %v129, 7
    %v131 = vsub.s32 0, %v130
    %v132 = vrot.slane %v127, %v131
    %v134 = vmul.f32 %v31, %v132
    %v135 = vmul.f32 %v32, %v132
    %v136 = vmul.f32 %v33, %v132
    %v137 = vmul.f32 %v34, %v132
    %v138 = vmul.f32 %v35, %v132
    %v139 = vmul.f32 %v36, %v132
    %v140 = vmul.f32 %v37, %v132
    %v141 = vmul.f32 %v38, %v132
    %v142 = vmul.f32 %v39, %v132
    %v143 = vmul.f32 %v40, %v132
    %v144 = vmul.f32 %v41, %v132
    %v145 = vmul.f32 %v42, %v132
    %v146 = vmul.f32 %v43, %v132
    %v147 = vmul.f32 %v44, %v132
    %v148 = vmul.f32 %v45, %v132
    %v149 = vmul.f32 %v46, %v132
    %v150 = vmul.f32 %v47, %v132
    %v151 = vmul.f32 %v48, %v132
    %v152 = vmul.f32 %v49, %v132
    %v153 = vmul.f32 %v50, %v132
    %v154 = vmul.f32 %v51, %v132
    %v155 = vmul.f32 %v52, %v132
    %v156 = vmul.f32 %v53, %v132
    %v157 = vmul.f32 %v54, %v132
    %v158 = vmul.f32 %v55, %v132
    %v159 = vmul.f32 %v56, %v132
    %v160 = vmul.f32 %v57, %v132
    %v161 = vmul.f32 %v58, %v132
    %v162 = vmul.f32 %v59, %v132
    %v163 = vmul.f32 %v60, %v132
    %v164 = vmul.f32 %v61, %v132
    %v165 = vmul.f32 %v62, %v132
    %v166 = vmul.f32 %v63, %v132
    %v167 = vmul.f32 %v64, %v132
    %v168 = vmul.f32 %v65, %v132
    %v169 = vmul.f32 %v66, %v132
    %v170 = vmul.f32 %v67, %v132
    %v171 = vmul.f32 %v68, %v132
    %v172 = vmul.f32 %v69, %v132
    %v173 = vmul.f32 %v70, %v132
    %v174 = vmul.f32 %v71, %v132
    %v175 = vmul.f32 %v72, %v132
    %v176 = vmul.f32 %v73, %v132
    %v177 = vmul.f32 %v74, %v132
    %v178 = vmul.f32 %v75, %v132
    %v179 = vmul.f32 %v76, %v132
    %v180 = vmul.f32 %v77, %v132
    %v181 = vmul.f32 %v78, %v132
    %v182 = vmul.f32 %v79, %v132
    %v183 = vmul.f32 %v80, %v132
    %v184 = vmul.f32 %v81, %v132
    %v185 = vmul.f32 %v82, %v132
    %v186 = vmul.f32 %v83, %v132
    %v187 = vmul.f32 %v84, %v132
    %v188 = vmul.f32 %v85, %v132
    %v189 = vmul.f32 %v86, %v132
    %v190 = vmul.f32 %v87, %v132
    %v191 = vmul.f32 %v88, %v132
    %v192 = vmul.f32 %v89, %v132
    %v193 = vmul.f32 %v90, %v132
    %v194 = vmul.f32 %v91, %v132
    %v195 = vmul.f32 %v92, %v132
    %v196 = vmul.f32 %v93, %v132
    %v197 = vmul.f32 %v94, %v132
    %198 = vadd.xlane.f32.xlu0 %v134
    %v199 = vpop.xlane.xlu0 %198
    %200 = vadd.xlane.f32.xlu0 %v135
    %v201 = vpop.xlane.xlu0 %200
    %202 = vadd.xlane.f32.xlu0 %v136
    %v203 = vpop.xlane.xlu0 %202
    %204 = vadd.xlane.f32.xlu0 %v137
    %v205 = vpop.xlane.xlu0 %204
    %206 = vadd.xlane.f32.xlu0 %v138
    %v207 = vpop.xlane.xlu0 %206
    %208 = vadd.xlane.f32.xlu0 %v139
    %v209 = vpop.xlane.xlu0 %208
    %210 = vadd.xlane.f32.xlu0 %v140
    %v211 = vpop.xlane.xlu0 %210
    %212 = vadd.xlane.f32.xlu0 %v141
    %v213 = vpop.xlane.xlu0 %212
    %214 = vadd.xlane.f32.xlu0 %v142
    %v215 = vpop.xlane.xlu0 %214
    %216 = vadd.xlane.f32.xlu0 %v143
    %v217 = vpop.xlane.xlu0 %216
    %218 = vadd.xlane.f32.xlu0 %v144
    %v219 = vpop.xlane.xlu0 %218
    %220 = vadd.xlane.f32.xlu0 %v145
    %v221 = vpop.xlane.xlu0 %220
    %222 = vadd.xlane.f32.xlu0 %v146
    %v223 = vpop.xlane.xlu0 %222
    %224 = vadd.xlane.f32.xlu0 %v147
    %v225 = vpop.xlane.xlu0 %224
    %226 = vadd.xlane.f32.xlu0 %v148
    %v227 = vpop.xlane.xlu0 %226
    %228 = vadd.xlane.f32.xlu0 %v149
    %v229 = vpop.xlane.xlu0 %228
    %230 = vadd.xlane.f32.xlu0 %v150
    %v231 = vpop.xlane.xlu0 %230
    %232 = vadd.xlane.f32.xlu0 %v151
    %v233 = vpop.xlane.xlu0 %232
    %234 = vadd.xlane.f32.xlu0 %v152
    %v235 = vpop.xlane.xlu0 %234
    %236 = vadd.xlane.f32.xlu0 %v153
    %v237 = vpop.xlane.xlu0 %236
    %238 = vadd.xlane.f32.xlu0 %v154
    %v239 = vpop.xlane.xlu0 %238
    %240 = vadd.xlane.f32.xlu0 %v155
    %v241 = vpop.xlane.xlu0 %240
    %242 = vadd.xlane.f32.xlu0 %v156
    %v243 = vpop.xlane.xlu0 %242
    %244 = vadd.xlane.f32.xlu0 %v157
    %v245 = vpop.xlane.xlu0 %244
    %246 = vadd.xlane.f32.xlu0 %v158
    %v247 = vpop.xlane.xlu0 %246
    %248 = vadd.xlane.f32.xlu0 %v159
    %v249 = vpop.xlane.xlu0 %248
    %250 = vadd.xlane.f32.xlu0 %v160
    %v251 = vpop.xlane.xlu0 %250
    %252 = vadd.xlane.f32.xlu0 %v161
    %v253 = vpop.xlane.xlu0 %252
    %254 = vadd.xlane.f32.xlu0 %v162
    %v255 = vpop.xlane.xlu0 %254
    %256 = vadd.xlane.f32.xlu0 %v163
    %v257 = vpop.xlane.xlu0 %256
    %258 = vadd.xlane.f32.xlu0 %v164
    %v259 = vpop.xlane.xlu0 %258
    %260 = vadd.xlane.f32.xlu0 %v165
    %v261 = vpop.xlane.xlu0 %260
    %262 = vadd.xlane.f32.xlu0 %v166
    %v263 = vpop.xlane.xlu0 %262
    %264 = vadd.xlane.f32.xlu0 %v167
    %v265 = vpop.xlane.xlu0 %264
    %266 = vadd.xlane.f32.xlu0 %v168
    %v267 = vpop.xlane.xlu0 %266
    %268 = vadd.xlane.f32.xlu0 %v169
    %v269 = vpop.xlane.xlu0 %268
    %270 = vadd.xlane.f32.xlu0 %v170
    %v271 = vpop.xlane.xlu0 %270
    %272 = vadd.xlane.f32.xlu0 %v171
    %v273 = vpop.xlane.xlu0 %272
    %274 = vadd.xlane.f32.xlu0 %v172
    %v275 = vpop.xlane.xlu0 %274
    %276 = vadd.xlane.f32.xlu0 %v173
    %v277 = vpop.xlane.xlu0 %276
    %278 = vadd.xlane.f32.xlu0 %v174
    %v279 = vpop.xlane.xlu0 %278
    %280 = vadd.xlane.f32.xlu0 %v175
    %v281 = vpop.xlane.xlu0 %280
    %282 = vadd.xlane.f32.xlu0 %v176
    %v283 = vpop.xlane.xlu0 %282
    %284 = vadd.xlane.f32.xlu0 %v177
    %v285 = vpop.xlane.xlu0 %284
    %286 = vadd.xlane.f32.xlu0 %v178
    %v287 = vpop.xlane.xlu0 %286
    %288 = vadd.xlane.f32.xlu0 %v179
    %v289 = vpop.xlane.xlu0 %288
    %290 = vadd.xlane.f32.xlu0 %v180
    %v291 = vpop.xlane.xlu0 %290
    %292 = vadd.xlane.f32.xlu0 %v181
    %v293 = vpop.xlane.xlu0 %292
    %294 = vadd.xlane.f32.xlu0 %v182
    %v295 = vpop.xlane.xlu0 %294
    %296 = vadd.xlane.f32.xlu0 %v183
    %v297 = vpop.xlane.xlu0 %296
    %298 = vadd.xlane.f32.xlu0 %v184
    %v299 = vpop.xlane.xlu0 %298
    %300 = vadd.xlane.f32.xlu0 %v185
    %v301 = vpop.xlane.xlu0 %300
    %302 = vadd.xlane.f32.xlu0 %v186
    %v303 = vpop.xlane.xlu0 %302
    %304 = vadd.xlane.f32.xlu0 %v187
    %v305 = vpop.xlane.xlu0 %304
    %306 = vadd.xlane.f32.xlu0 %v188
    %v307 = vpop.xlane.xlu0 %306
    %308 = vadd.xlane.f32.xlu0 %v189
    %v309 = vpop.xlane.xlu0 %308
    %310 = vadd.xlane.f32.xlu0 %v190
    %v311 = vpop.xlane.xlu0 %310
    %312 = vadd.xlane.f32.xlu0 %v191
    %v313 = vpop.xlane.xlu0 %312
    %314 = vadd.xlane.f32.xlu0 %v192
    %v315 = vpop.xlane.xlu0 %314
    %316 = vadd.xlane.f32.xlu0 %v193
    %v317 = vpop.xlane.xlu0 %316
    %318 = vadd.xlane.f32.xlu0 %v194
    %v319 = vpop.xlane.xlu0 %318
    %320 = vadd.xlane.f32.xlu0 %v195
    %v321 = vpop.xlane.xlu0 %320
    %322 = vadd.xlane.f32.xlu0 %v196
    %v323 = vpop.xlane.xlu0 %322
    %324 = vadd.xlane.f32.xlu0 %v197
    %v325 = vpop.xlane.xlu0 %324
    %v326 = vmax.f32 %v199, %v201
    %v327 = vmax.f32 %v326, %v203
    %v328 = vmax.f32 %v327, %v205
    %v329 = vmax.f32 %v328, %v207
    %v330 = vmax.f32 %v329, %v209
    %v331 = vmax.f32 %v330, %v211
    %v332 = vmax.f32 %v331, %v213
    %v333 = vrot.slane %v332, 4
    %v334 = vmax.f32 %v332, %v333
    %v335 = vrot.slane %v334, 2
    %v336 = vmax.f32 %v334, %v335
    %v337 = vrot.slane %v336, 1
    %v338 = vmax.f32 %v336, %v337
    %v339 = vmax.f32 %v215, %v217
    %v340 = vmax.f32 %v339, %v219
    %v341 = vmax.f32 %v340, %v221
    %v342 = vmax.f32 %v341, %v223
    %v343 = vmax.f32 %v342, %v225
    %v344 = vmax.f32 %v343, %v227
    %v345 = vmax.f32 %v344, %v229
    %v346 = vrot.slane %v345, 4
    %v347 = vmax.f32 %v345, %v346
    %v348 = vrot.slane %v347, 2
    %v349 = vmax.f32 %v347, %v348
    %v350 = vrot.slane %v349, 1
    %v351 = vmax.f32 %v349, %v350
    %v352 = vmax.f32 %v231, %v233
    %v353 = vmax.f32 %v352, %v235
    %v354 = vmax.f32 %v353, %v237
    %v355 = vmax.f32 %v354, %v239
    %v356 = vmax.f32 %v355, %v241
    %v357 = vmax.f32 %v356, %v243
    %v358 = vmax.f32 %v357, %v245
    %v359 = vrot.slane %v358, 4
    %v360 = vmax.f32 %v358, %v359
    %v361 = vrot.slane %v360, 2
    %v362 = vmax.f32 %v360, %v361
    %v363 = vrot.slane %v362, 1
    %v364 = vmax.f32 %v362, %v363
    %v365 = vmax.f32 %v247, %v249
    %v366 = vmax.f32 %v365, %v251
    %v367 = vmax.f32 %v366, %v253
    %v368 = vmax.f32 %v367, %v255
    %v369 = vmax.f32 %v368, %v257
    %v370 = vmax.f32 %v369, %v259
    %v371 = vmax.f32 %v370, %v261
    %v372 = vrot.slane %v371, 4
    %v373 = vmax.f32 %v371, %v372
    %v374 = vrot.slane %v373, 2
    %v375 = vmax.f32 %v373, %v374
    %v376 = vrot.slane %v375, 1
    %v377 = vmax.f32 %v375, %v376
    %v378 = vmax.f32 %v263, %v265
    %v379 = vmax.f32 %v378, %v267
    %v380 = vmax.f32 %v379, %v269
    %v381 = vmax.f32 %v380, %v271
    %v382 = vmax.f32 %v381, %v273
    %v383 = vmax.f32 %v382, %v275
    %v384 = vmax.f32 %v383, %v277
    %v385 = vrot.slane %v384, 4
    %v386 = vmax.f32 %v384, %v385
    %v387 = vrot.slane %v386, 2
    %v388 = vmax.f32 %v386, %v387
    %v389 = vrot.slane %v388, 1
    %v390 = vmax.f32 %v388, %v389
    %v391 = vmax.f32 %v279, %v281
    %v392 = vmax.f32 %v391, %v283
    %v393 = vmax.f32 %v392, %v285
    %v394 = vmax.f32 %v393, %v287
    %v395 = vmax.f32 %v394, %v289
    %v396 = vmax.f32 %v395, %v291
    %v397 = vmax.f32 %v396, %v293
    %v398 = vrot.slane %v397, 4
    %v399 = vmax.f32 %v397, %v398
    %v400 = vrot.slane %v399, 2
    %v401 = vmax.f32 %v399, %v400
    %v402 = vrot.slane %v401, 1
    %v403 = vmax.f32 %v401, %v402
    %v404 = vmax.f32 %v295, %v297
    %v405 = vmax.f32 %v404, %v299
    %v406 = vmax.f32 %v405, %v301
    %v407 = vmax.f32 %v406, %v303
    %v408 = vmax.f32 %v407, %v305
    %v409 = vmax.f32 %v408, %v307
    %v410 = vmax.f32 %v409, %v309
    %v411 = vrot.slane %v410, 4
    %v412 = vmax.f32 %v410, %v411
    %v413 = vrot.slane %v412, 2
    %v414 = vmax.f32 %v412, %v413
    %v415 = vrot.slane %v414, 1
    %v416 = vmax.f32 %v414, %v415
    %v417 = vmax.f32 %v311, %v313
    %v418 = vmax.f32 %v417, %v315
    %v419 = vmax.f32 %v418, %v317
    %v420 = vmax.f32 %v419, %v319
    %v421 = vmax.f32 %v420, %v321
    %v422 = vmax.f32 %v421, %v323
    %v423 = vmax.f32 %v422, %v325
    %v424 = vrot.slane %v423, 4
    %v425 = vmax.f32 %v423, %v424
    %v426 = vrot.slane %v425, 2
    %v427 = vmax.f32 %v425, %v426
    %v428 = vrot.slane %v427, 1
    %v429 = vmax.f32 %v427, %v428
    %v430 = vsub.f32 %v199, %v338
    %v431 = vsub.f32 %v201, %v338
    %v432 = vsub.f32 %v203, %v338
    %v433 = vsub.f32 %v205, %v338
    %v434 = vsub.f32 %v207, %v338
    %v435 = vsub.f32 %v209, %v338
    %v436 = vsub.f32 %v211, %v338
    %v437 = vsub.f32 %v213, %v338
    %v438 = vsub.f32 %v215, %v351
    %v439 = vsub.f32 %v217, %v351
    %v440 = vsub.f32 %v219, %v351
    %v441 = vsub.f32 %v221, %v351
    %v442 = vsub.f32 %v223, %v351
    %v443 = vsub.f32 %v225, %v351
    %v444 = vsub.f32 %v227, %v351
    %v445 = vsub.f32 %v229, %v351
    %v446 = vsub.f32 %v231, %v364
    %v447 = vsub.f32 %v233, %v364
    %v448 = vsub.f32 %v235, %v364
    %v449 = vsub.f32 %v237, %v364
    %v450 = vsub.f32 %v239, %v364
    %v451 = vsub.f32 %v241, %v364
    %v452 = vsub.f32 %v243, %v364
    %v453 = vsub.f32 %v245, %v364
    %v454 = vsub.f32 %v247, %v377
    %v455 = vsub.f32 %v249, %v377
    %v456 = vsub.f32 %v251, %v377
    %v457 = vsub.f32 %v253, %v377
    %v458 = vsub.f32 %v255, %v377
    %v459 = vsub.f32 %v257, %v377
    %v460 = vsub.f32 %v259, %v377
    %v461 = vsub.f32 %v261, %v377
    %v462 = vsub.f32 %v263, %v390
    %v463 = vsub.f32 %v265, %v390
    %v464 = vsub.f32 %v267, %v390
    %v465 = vsub.f32 %v269, %v390
    %v466 = vsub.f32 %v271, %v390
    %v467 = vsub.f32 %v273, %v390
    %v468 = vsub.f32 %v275, %v390
    %v469 = vsub.f32 %v277, %v390
    %v470 = vsub.f32 %v279, %v403
    %v471 = vsub.f32 %v281, %v403
    %v472 = vsub.f32 %v283, %v403
    %v473 = vsub.f32 %v285, %v403
    %v474 = vsub.f32 %v287, %v403
    %v475 = vsub.f32 %v289, %v403
    %v476 = vsub.f32 %v291, %v403
    %v477 = vsub.f32 %v293, %v403
    %v478 = vsub.f32 %v295, %v416
    %v479 = vsub.f32 %v297, %v416
    %v480 = vsub.f32 %v299, %v416
    %v481 = vsub.f32 %v301, %v416
    %v482 = vsub.f32 %v303, %v416
    %v483 = vsub.f32 %v305, %v416
    %v484 = vsub.f32 %v307, %v416
    %v485 = vsub.f32 %v309, %v416
    %v486 = vsub.f32 %v311, %v429
    %v487 = vsub.f32 %v313, %v429
    %v488 = vsub.f32 %v315, %v429
    %v489 = vsub.f32 %v317, %v429
    %v490 = vsub.f32 %v319, %v429
    %v491 = vsub.f32 %v321, %v429
    %v492 = vsub.f32 %v323, %v429
    %v493 = vsub.f32 %v325, %v429
    %v494 = vmul.f32 %v430, 1.442695
    %v495 = vpow.pop %v494
    %v496 = vmul.f32 %v431, 1.442695
    %v497 = vpow.pop %v496
    %v498 = vmul.f32 %v432, 1.442695
    %v499 = vpow.pop %v498
    %v500 = vmul.f32 %v433, 1.442695
    %v501 = vpow.pop %v500
    %v502 = vmul.f32 %v434, 1.442695
    %v503 = vpow.pop %v502
    %v504 = vmul.f32 %v435, 1.442695
    %v505 = vpow.pop %v504
    %v506 = vmul.f32 %v436, 1.442695
    %v507 = vpow.pop %v506
    %v508 = vmul.f32 %v437, 1.442695
    %v509 = vpow.pop %v508
    %v510 = vmul.f32 %v438, 1.442695
    %v511 = vpow.pop %v510
    %v512 = vmul.f32 %v439, 1.442695
    %v513 = vpow.pop %v512
    %v514 = vmul.f32 %v440, 1.442695
    %v515 = vpow.pop %v514
    %v516 = vmul.f32 %v441, 1.442695
    %v517 = vpow.pop %v516
    %v518 = vmul.f32 %v442, 1.442695
    %v519 = vpow.pop %v518
    %v520 = vmul.f32 %v443, 1.442695
    %v521 = vpow.pop %v520
    %v522 = vmul.f32 %v444, 1.442695
    %v523 = vpow.pop %v522
    %v524 = vmul.f32 %v445, 1.442695
    %v525 = vpow.pop %v524
    %v526 = vmul.f32 %v446, 1.442695
    %v527 = vpow.pop %v526
    %v528 = vmul.f32 %v447, 1.442695
    %v529 = vpow.pop %v528
    %v530 = vmul.f32 %v448, 1.442695
    %v531 = vpow.pop %v530
    %v532 = vmul.f32 %v449, 1.442695
    %v533 = vpow.pop %v532
    %v534 = vmul.f32 %v450, 1.442695
    %v535 = vpow.pop %v534
    %v536 = vmul.f32 %v451, 1.442695
    %v537 = vpow.pop %v536
    %v538 = vmul.f32 %v452, 1.442695
    %v539 = vpow.pop %v538
    %v540 = vmul.f32 %v453, 1.442695
    %v541 = vpow.pop %v540
    %v542 = vmul.f32 %v454, 1.442695
    %v543 = vpow.pop %v542
    %v544 = vmul.f32 %v455, 1.442695
    %v545 = vpow.pop %v544
    %v546 = vmul.f32 %v456, 1.442695
    %v547 = vpow.pop %v546
    %v548 = vmul.f32 %v457, 1.442695
    %v549 = vpow.pop %v548
    %v550 = vmul.f32 %v458, 1.442695
    %v551 = vpow.pop %v550
    %v552 = vmul.f32 %v459, 1.442695
    %v553 = vpow.pop %v552
    %v554 = vmul.f32 %v460, 1.442695
    %v555 = vpow.pop %v554
    %v556 = vmul.f32 %v461, 1.442695
    %v557 = vpow.pop %v556
    %v558 = vmul.f32 %v462, 1.442695
    %v559 = vpow.pop %v558
    %v560 = vmul.f32 %v463, 1.442695
    %v561 = vpow.pop %v560
    %v562 = vmul.f32 %v464, 1.442695
    %v563 = vpow.pop %v562
    %v564 = vmul.f32 %v465, 1.442695
    %v565 = vpow.pop %v564
    %v566 = vmul.f32 %v466, 1.442695
    %v567 = vpow.pop %v566
    %v568 = vmul.f32 %v467, 1.442695
    %v569 = vpow.pop %v568
    %v570 = vmul.f32 %v468, 1.442695
    %v571 = vpow.pop %v570
    %v572 = vmul.f32 %v469, 1.442695
    %v573 = vpow.pop %v572
    %v574 = vmul.f32 %v470, 1.442695
    %v575 = vpow.pop %v574
    %v576 = vmul.f32 %v471, 1.442695
    %v577 = vpow.pop %v576
    %v578 = vmul.f32 %v472, 1.442695
    %v579 = vpow.pop %v578
    %v580 = vmul.f32 %v473, 1.442695
    %v581 = vpow.pop %v580
    %v582 = vmul.f32 %v474, 1.442695
    %v583 = vpow.pop %v582
    %v584 = vmul.f32 %v475, 1.442695
    %v585 = vpow.pop %v584
    %v586 = vmul.f32 %v476, 1.442695
    %v587 = vpow.pop %v586
    %v588 = vmul.f32 %v477, 1.442695
    %v589 = vpow.pop %v588
    %v590 = vmul.f32 %v478, 1.442695
    %v591 = vpow.pop %v590
    %v592 = vmul.f32 %v479, 1.442695
    %v593 = vpow.pop %v592
    %v594 = vmul.f32 %v480, 1.442695
    %v595 = vpow.pop %v594
    %v596 = vmul.f32 %v481, 1.442695
    %v597 = vpow.pop %v596
    %v598 = vmul.f32 %v482, 1.442695
    %v599 = vpow.pop %v598
    %v600 = vmul.f32 %v483, 1.442695
    %v601 = vpow.pop %v600
    %v602 = vmul.f32 %v484, 1.442695
    %v603 = vpow.pop %v602
    %v604 = vmul.f32 %v485, 1.442695
    %v605 = vpow.pop %v604
    %v606 = vmul.f32 %v486, 1.442695
    %v607 = vpow.pop %v606
    %v608 = vmul.f32 %v487, 1.442695
    %v609 = vpow.pop %v608
    %v610 = vmul.f32 %v488, 1.442695
    %v611 = vpow.pop %v610
    %v612 = vmul.f32 %v489, 1.442695
    %v613 = vpow.pop %v612
    %v614 = vmul.f32 %v490, 1.442695
    %v615 = vpow.pop %v614
    %v616 = vmul.f32 %v491, 1.442695
    %v617 = vpow.pop %v616
    %v618 = vmul.f32 %v492, 1.442695
    %v619 = vpow.pop %v618
    %v620 = vmul.f32 %v493, 1.442695
    %v621 = vpow.pop %v620
    %v622 = vadd.f32 %v495, %v497
    %v623 = vadd.f32 %v622, %v499
    %v624 = vadd.f32 %v623, %v501
    %v625 = vadd.f32 %v624, %v503
    %v626 = vadd.f32 %v625, %v505
    %v627 = vadd.f32 %v626, %v507
    %v628 = vadd.f32 %v627, %v509
    %v629 = vrot.slane %v628, 4
    %v630 = vadd.f32 %v628, %v629
    %v631 = vrot.slane %v630, 2
    %v632 = vadd.f32 %v630, %v631
    %v633 = vrot.slane %v632, 1
    %v634 = vadd.f32 %v632, %v633
    %v635 = vadd.f32 %v511, %v513
    %v636 = vadd.f32 %v635, %v515
    %v637 = vadd.f32 %v636, %v517
    %v638 = vadd.f32 %v637, %v519
    %v639 = vadd.f32 %v638, %v521
    %v640 = vadd.f32 %v639, %v523
    %v641 = vadd.f32 %v640, %v525
    %v642 = vrot.slane %v641, 4
    %v643 = vadd.f32 %v641, %v642
    %v644 = vrot.slane %v643, 2
    %v645 = vadd.f32 %v643, %v644
    %v646 = vrot.slane %v645, 1
    %v647 = vadd.f32 %v645, %v646
    %v648 = vadd.f32 %v527, %v529
    %v649 = vadd.f32 %v648, %v531
    %v650 = vadd.f32 %v649, %v533
    %v651 = vadd.f32 %v650, %v535
    %v652 = vadd.f32 %v651, %v537
    %v653 = vadd.f32 %v652, %v539
    %v654 = vadd.f32 %v653, %v541
    %v655 = vrot.slane %v654, 4
    %v656 = vadd.f32 %v654, %v655
    %v657 = vrot.slane %v656, 2
    %v658 = vadd.f32 %v656, %v657
    %v659 = vrot.slane %v658, 1
    %v660 = vadd.f32 %v658, %v659
    %v661 = vadd.f32 %v543, %v545
    %v662 = vadd.f32 %v661, %v547
    %v663 = vadd.f32 %v662, %v549
    %v664 = vadd.f32 %v663, %v551
    %v665 = vadd.f32 %v664, %v553
    %v666 = vadd.f32 %v665, %v555
    %v667 = vadd.f32 %v666, %v557
    %v668 = vrot.slane %v667, 4
    %v669 = vadd.f32 %v667, %v668
    %v670 = vrot.slane %v669, 2
    %v671 = vadd.f32 %v669, %v670
    %v672 = vrot.slane %v671, 1
    %v673 = vadd.f32 %v671, %v672
    %v674 = vadd.f32 %v559, %v561
    %v675 = vadd.f32 %v674, %v563
    %v676 = vadd.f32 %v675, %v565
    %v677 = vadd.f32 %v676, %v567
    %v678 = vadd.f32 %v677, %v569
    %v679 = vadd.f32 %v678, %v571
    %v680 = vadd.f32 %v679, %v573
    %v681 = vrot.slane %v680, 4
    %v682 = vadd.f32 %v680, %v681
    %v683 = vrot.slane %v682, 2
    %v684 = vadd.f32 %v682, %v683
    %v685 = vrot.slane %v684, 1
    %v686 = vadd.f32 %v684, %v685
    %v687 = vadd.f32 %v575, %v577
    %v688 = vadd.f32 %v687, %v579
    %v689 = vadd.f32 %v688, %v581
    %v690 = vadd.f32 %v689, %v583
    %v691 = vadd.f32 %v690, %v585
    %v692 = vadd.f32 %v691, %v587
    %v693 = vadd.f32 %v692, %v589
    %v694 = vrot.slane %v693, 4
    %v695 = vadd.f32 %v693, %v694
    %v696 = vrot.slane %v695, 2
    %v697 = vadd.f32 %v695, %v696
    %v698 = vrot.slane %v697, 1
    %v699 = vadd.f32 %v697, %v698
    %v700 = vadd.f32 %v591, %v593
    %v701 = vadd.f32 %v700, %v595
    %v702 = vadd.f32 %v701, %v597
    %v703 = vadd.f32 %v702, %v599
    %v704 = vadd.f32 %v703, %v601
    %v705 = vadd.f32 %v704, %v603
    %v706 = vadd.f32 %v705, %v605
    %v707 = vrot.slane %v706, 4
    %v708 = vadd.f32 %v706, %v707
    %v709 = vrot.slane %v708, 2
    %v710 = vadd.f32 %v708, %v709
    %v711 = vrot.slane %v710, 1
    %v712 = vadd.f32 %v710, %v711
    %v713 = vadd.f32 %v607, %v609
    %v714 = vadd.f32 %v713, %v611
    %v715 = vadd.f32 %v714, %v613
    %v716 = vadd.f32 %v715, %v615
    %v717 = vadd.f32 %v716, %v617
    %v718 = vadd.f32 %v717, %v619
    %v719 = vadd.f32 %v718, %v621
    %v720 = vrot.slane %v719, 4
    %v721 = vadd.f32 %v719, %v720
    %v722 = vrot.slane %v721, 2
    %v723 = vadd.f32 %v721, %v722
    %v724 = vrot.slane %v723, 1
    %v725 = vadd.f32 %v723, %v724
    %v726 = vrcp.pop %v634
    %v727 = vrcp.pop %v647
    %v728 = vrcp.pop %v660
    %v729 = vrcp.pop %v673
    %v730 = vrcp.pop %v686
    %v731 = vrcp.pop %v699
    %v732 = vrcp.pop %v712
    %v733 = vrcp.pop %v725
    %v734 = vmul.f32 %v495, %v726
    %v735 = vmul.f32 %v497, %v726
    %v736 = vmul.f32 %v499, %v726
    %v737 = vmul.f32 %v501, %v726
    %v738 = vmul.f32 %v503, %v726
    %v739 = vmul.f32 %v505, %v726
    %v740 = vmul.f32 %v507, %v726
    %v741 = vmul.f32 %v509, %v726
    %v742 = vmul.f32 %v511, %v727
    %v743 = vmul.f32 %v513, %v727
    %v744 = vmul.f32 %v515, %v727
    %v745 = vmul.f32 %v517, %v727
    %v746 = vmul.f32 %v519, %v727
    %v747 = vmul.f32 %v521, %v727
    %v748 = vmul.f32 %v523, %v727
    %v749 = vmul.f32 %v525, %v727
    %v750 = vmul.f32 %v527, %v728
    %v751 = vmul.f32 %v529, %v728
    %v752 = vmul.f32 %v531, %v728
    %v753 = vmul.f32 %v533, %v728
    %v754 = vmul.f32 %v535, %v728
    %v755 = vmul.f32 %v537, %v728
    %v756 = vmul.f32 %v539, %v728
    %v757 = vmul.f32 %v541, %v728
    %v758 = vmul.f32 %v543, %v729
    %v759 = vmul.f32 %v545, %v729
    %v760 = vmul.f32 %v547, %v729
    %v761 = vmul.f32 %v549, %v729
    %v762 = vmul.f32 %v551, %v729
    %v763 = vmul.f32 %v553, %v729
    %v764 = vmul.f32 %v555, %v729
    %v765 = vmul.f32 %v557, %v729
    %v766 = vmul.f32 %v559, %v730
    %v767 = vmul.f32 %v561, %v730
    %v768 = vmul.f32 %v563, %v730
    %v769 = vmul.f32 %v565, %v730
    %v770 = vmul.f32 %v567, %v730
    %v771 = vmul.f32 %v569, %v730
    %v772 = vmul.f32 %v571, %v730
    %v773 = vmul.f32 %v573, %v730
    %v774 = vmul.f32 %v575, %v731
    %v775 = vmul.f32 %v577, %v731
    %v776 = vmul.f32 %v579, %v731
    %v777 = vmul.f32 %v581, %v731
    %v778 = vmul.f32 %v583, %v731
    %v779 = vmul.f32 %v585, %v731
    %v780 = vmul.f32 %v587, %v731
    %v781 = vmul.f32 %v589, %v731
    %v782 = vmul.f32 %v591, %v732
    %v783 = vmul.f32 %v593, %v732
    %v784 = vmul.f32 %v595, %v732
    %v785 = vmul.f32 %v597, %v732
    %v786 = vmul.f32 %v599, %v732
    %v787 = vmul.f32 %v601, %v732
    %v788 = vmul.f32 %v603, %v732
    %v789 = vmul.f32 %v605, %v732
    %v790 = vmul.f32 %v607, %v733
    %v791 = vmul.f32 %v609, %v733
    %v792 = vmul.f32 %v611, %v733
    %v793 = vmul.f32 %v613, %v733
    %v794 = vmul.f32 %v615, %v733
    %v795 = vmul.f32 %v617, %v733
    %v796 = vmul.f32 %v619, %v733
    %v797 = vmul.f32 %v621, %v733
    %v798 = vld [vmem:[%s2] sm:$0xf]
    %v799 = vld [vmem:[%s2 + $0x4] sm:$0xf]
    %v800 = vld [vmem:[%s2 + $0x8] sm:$0xf]
    %v801 = vld [vmem:[%s2 + $0xc] sm:$0xf]
    %v802 = vld [vmem:[%s2 + $0x10] sm:$0xf]
    %v803 = vld [vmem:[%s2 + $0x14] sm:$0xf]
    %v804 = vld [vmem:[%s2 + $0x18] sm:$0xf]
    %v805 = vld [vmem:[%s2 + $0x1c] sm:$0xf]
    %v806 = vld [vmem:[%s2 + $0x20] sm:$0xf]
    %v807 = vld [vmem:[%s2 + $0x24] sm:$0xf]
    %v808 = vld [vmem:[%s2 + $0x28] sm:$0xf]
    %v809 = vld [vmem:[%s2 + $0x2c] sm:$0xf]
    %v810 = vld [vmem:[%s2 + $0x30] sm:$0xf]
    %v811 = vld [vmem:[%s2 + $0x34] sm:$0xf]
    %v812 = vld [vmem:[%s2 + $0x38] sm:$0xf]
    %v813 = vld [vmem:[%s2 + $0x3c] sm:$0xf]
    %v814 = vld [vmem:[%s3] sm:$0x1]
    %v816 = vlaneseq
    %v817 = vshrl.u32 %v816, 7
    %v818 = vsub.s32 0, %v817
    %v819 = vrot.slane %v814, %v818
    %v837 = vunpack.c.l.b16 %v798
    %v838 = vunpack.c.l.b16 %v799
    %v839 = vunpack.c.l.b16 %v800
    %v840 = vunpack.c.l.b16 %v801
    %v841 = vunpack.c.l.b16 %v802
    %v842 = vunpack.c.l.b16 %v803
    %v843 = vunpack.c.l.b16 %v804
    %v844 = vunpack.c.l.b16 %v805
    %v845 = vunpack.c.l.b16 %v806
    %v846 = vunpack.c.l.b16 %v807
    %v847 = vunpack.c.l.b16 %v808
    %v848 = vunpack.c.l.b16 %v809
    %v849 = vunpack.c.l.b16 %v810
    %v850 = vunpack.c.l.b16 %v811
    %v851 = vunpack.c.l.b16 %v812
    %v852 = vunpack.c.l.b16 %v813
    %v853 = vpack.c.b16 %v838, %v837
    %v854 = vpack.c.b16 %v840, %v839
    %v855 = vpack.c.b16 %v842, %v841
    %v856 = vpack.c.b16 %v844, %v843
    %v857 = vpack.c.b16 %v846, %v845
    %v858 = vpack.c.b16 %v848, %v847
    %v859 = vpack.c.b16 %v850, %v849
    %v860 = vpack.c.b16 %v852, %v851
    %869 = vmatprep.subr.bf16.mxu0 0
    %870 = vmatpush1.bf16.msra.mxu0 %v860
    %871 = vmatprep.subr.bf16.mxu0 0
    %872 = vmatpush1.bf16.msra.mxu0 %v859
    %873 = vmatprep.subr.bf16.mxu0 0
    %874 = vmatpush1.bf16.msra.mxu0 %v858
    %875 = vmatprep.subr.bf16.mxu0 0
    %876 = vmatpush1.bf16.msra.mxu0 %v857
    %877 = vmatprep.subr.bf16.mxu0 0
    %878 = vmatpush1.bf16.msra.mxu0 %v856
    %879 = vmatprep.subr.bf16.mxu0 0
    %880 = vmatpush1.bf16.msra.mxu0 %v855
    %881 = vmatprep.subr.bf16.mxu0 0
    %882 = vmatpush1.bf16.msra.mxu0 %v854
    %883 = vmatprep.subr.bf16.mxu0 0
    %884 = vmatpush1.bf16.msra.mxu0 %v853
    %885 = vmatprep.subr.bf16.mxu0 0
    %886 = vmatpush2.bf16.msra.mxu0 0
    %887 = vmatprep.subr.bf16.mxu0 0
    %888 = vmatpush2.bf16.msra.mxu0 0
    %889 = vmatprep.subr.bf16.mxu0 0
    %890 = vmatpush2.bf16.msra.mxu0 0
    %891 = vmatprep.subr.bf16.mxu0 0
    %892 = vmatpush2.bf16.msra.mxu0 0
    %893 = vmatprep.subr.bf16.mxu0 0
    %894 = vmatpush2.bf16.msra.mxu0 0
    %895 = vmatprep.subr.bf16.mxu0 0
    %896 = vmatpush2.bf16.msra.mxu0 0
    %897 = vmatprep.subr.bf16.mxu0 0
    %898 = vmatpush2.bf16.msra.mxu0 0
    %899 = vmatprep.subr.bf16.mxu0 0
    %900 = vmatpush2.bf16.msra.mxu0 0
    %901 = vmatprep.mubr.bf16.mxu0 0
    %902 = vmatmul.mubr.bf16.gmra.mxu0 %v95
    %v903 = vpop.f32.mrf.mxu0
    %v904 = vadd.f32 %v819, %v903
    %v905 = vpop.f32.mrf.mxu0
    %v906 = vpop.f32.mrf.mxu0
    %v907 = vadd.f32 %v819, %v906
    %v908 = vpop.f32.mrf.mxu0
    %909 = vmatprep.mubr.bf16.mxu0 0
    %910 = vmatmul.mubr.bf16.gmra.mxu0 %v96
    %v911 = vpop.f32.mrf.mxu0
    %v912 = vadd.f32 %v819, %v911
    %v913 = vpop.f32.mrf.mxu0
    %v914 = vpop.f32.mrf.mxu0
    %v915 = vadd.f32 %v819, %v914
    %v916 = vpop.f32.mrf.mxu0
    %917 = vmatprep.mubr.bf16.mxu0 0
    %918 = vmatmul.mubr.bf16.gmra.mxu0 %v97
    %v919 = vpop.f32.mrf.mxu0
    %v920 = vadd.f32 %v819, %v919
    %v921 = vpop.f32.mrf.mxu0
    %v922 = vpop.f32.mrf.mxu0
    %v923 = vadd.f32 %v819, %v922
    %v924 = vpop.f32.mrf.mxu0
    %925 = vmatprep.mubr.bf16.mxu0 0
    %926 = vmatmul.mubr.bf16.gmra.mxu0 %v98
    %v927 = vpop.f32.mrf.mxu0
    %v928 = vadd.f32 %v819, %v927
    %v929 = vpop.f32.mrf.mxu0
    %v930 = vpop.f32.mrf.mxu0
    %v931 = vadd.f32 %v819, %v930
    %v932 = vpop.f32.mrf.mxu0
    %933 = vmatprep.mubr.bf16.mxu0 0
    %934 = vmatmul.mubr.bf16.gmra.mxu0 %v99
    %v935 = vpop.f32.mrf.mxu0
    %v936 = vadd.f32 %v819, %v935
    %v937 = vpop.f32.mrf.mxu0
    %v938 = vpop.f32.mrf.mxu0
    %v939 = vadd.f32 %v819, %v938
    %v940 = vpop.f32.mrf.mxu0
    %941 = vmatprep.mubr.bf16.mxu0 0
    %942 = vmatmul.mubr.bf16.gmra.mxu0 %v100
    %v943 = vpop.f32.mrf.mxu0
    %v944 = vadd.f32 %v819, %v943
    %v945 = vpop.f32.mrf.mxu0
    %v946 = vpop.f32.mrf.mxu0
    %v947 = vadd.f32 %v819, %v946
    %v948 = vpop.f32.mrf.mxu0
    %949 = vmatprep.mubr.bf16.mxu0 0
    %950 = vmatmul.mubr.bf16.gmra.mxu0 %v101
    %v951 = vpop.f32.mrf.mxu0
    %v952 = vadd.f32 %v819, %v951
    %v953 = vpop.f32.mrf.mxu0
    %v954 = vpop.f32.mrf.mxu0
    %v955 = vadd.f32 %v819, %v954
    %v956 = vpop.f32.mrf.mxu0
    %957 = vmatprep.mubr.bf16.mxu0 0
    %958 = vmatmul.mubr.bf16.gmra.mxu0 %v102
    %v959 = vpop.f32.mrf.mxu0
    %v960 = vadd.f32 %v819, %v959
    %v961 = vpop.f32.mrf.mxu0
    %v962 = vpop.f32.mrf.mxu0
    %v963 = vadd.f32 %v819, %v962
    %v964 = vpop.f32.mrf.mxu0
    %965 = vmatprep.mubr.bf16.mxu0 0
    %966 = vmatmul.mubr.bf16.gmra.mxu0 %v103
    %v967 = vpop.f32.mrf.mxu0
    %v968 = vadd.f32 %v819, %v967
    %v969 = vpop.f32.mrf.mxu0
    %v970 = vpop.f32.mrf.mxu0
    %v971 = vadd.f32 %v819, %v970
    %v972 = vpop.f32.mrf.mxu0
    %973 = vmatprep.mubr.bf16.mxu0 0
    %974 = vmatmul.mubr.bf16.gmra.mxu0 %v104
    %v975 = vpop.f32.mrf.mxu0
    %v976 = vadd.f32 %v819, %v975
    %v977 = vpop.f32.mrf.mxu0
    %v978 = vpop.f32.mrf.mxu0
    %v979 = vadd.f32 %v819, %v978
    %v980 = vpop.f32.mrf.mxu0
    %981 = vmatprep.mubr.bf16.mxu0 0
    %982 = vmatmul.mubr.bf16.gmra.mxu0 %v105
    %v983 = vpop.f32.mrf.mxu0
    %v984 = vadd.f32 %v819, %v983
    %v985 = vpop.f32.mrf.mxu0
    %v986 = vpop.f32.mrf.mxu0
    %v987 = vadd.f32 %v819, %v986
    %v988 = vpop.f32.mrf.mxu0
    %989 = vmatprep.mubr.bf16.mxu0 0
    %990 = vmatmul.mubr.bf16.gmra.mxu0 %v106
    %v991 = vpop.f32.mrf.mxu0
    %v992 = vadd.f32 %v819, %v991
    %v993 = vpop.f32.mrf.mxu0
    %v994 = vpop.f32.mrf.mxu0
    %v995 = vadd.f32 %v819, %v994
    %v996 = vpop.f32.mrf.mxu0
    %997 = vmatprep.mubr.bf16.mxu0 0
    %998 = vmatmul.mubr.bf16.gmra.mxu0 %v107
    %v999 = vpop.f32.mrf.mxu0
    %v1000 = vadd.f32 %v819, %v999
    %v1001 = vpop.f32.mrf.mxu0
    %v1002 = vpop.f32.mrf.mxu0
    %v1003 = vadd.f32 %v819, %v1002
    %v1004 = vpop.f32.mrf.mxu0
    %1005 = vmatprep.mubr.bf16.mxu0 0
    %1006 = vmatmul.mubr.bf16.gmra.mxu0 %v108
    %v1007 = vpop.f32.mrf.mxu0
    %v1008 = vadd.f32 %v819, %v1007
    %v1009 = vpop.f32.mrf.mxu0
    %v1010 = vpop.f32.mrf.mxu0
    %v1011 = vadd.f32 %v819, %v1010
    %v1012 = vpop.f32.mrf.mxu0
    %1013 = vmatprep.mubr.bf16.mxu0 0
    %1014 = vmatmul.mubr.bf16.gmra.mxu0 %v109
    %v1015 = vpop.f32.mrf.mxu0
    %v1016 = vadd.f32 %v819, %v1015
    %v1017 = vpop.f32.mrf.mxu0
    %v1018 = vpop.f32.mrf.mxu0
    %v1019 = vadd.f32 %v819, %v1018
    %v1020 = vpop.f32.mrf.mxu0
    %1021 = vmatprep.mubr.bf16.mxu0 0
    %1022 = vmatmul.mubr.bf16.gmra.mxu0 %v110
    %v1023 = vpop.f32.mrf.mxu0
    %v1024 = vadd.f32 %v819, %v1023
    %v1025 = vpop.f32.mrf.mxu0
    %v1026 = vpop.f32.mrf.mxu0
    %v1027 = vadd.f32 %v819, %v1026
    %v1028 = vpop.f32.mrf.mxu0
    %1029 = vmatprep.mubr.bf16.mxu0 0
    %1030 = vmatmul.mubr.bf16.gmra.mxu0 %v111
    %v1031 = vpop.f32.mrf.mxu0
    %v1032 = vadd.f32 %v819, %v1031
    %v1033 = vpop.f32.mrf.mxu0
    %v1034 = vpop.f32.mrf.mxu0
    %v1035 = vadd.f32 %v819, %v1034
    %v1036 = vpop.f32.mrf.mxu0
    %1037 = vmatprep.mubr.bf16.mxu0 0
    %1038 = vmatmul.mubr.bf16.gmra.mxu0 %v112
    %v1039 = vpop.f32.mrf.mxu0
    %v1040 = vadd.f32 %v819, %v1039
    %v1041 = vpop.f32.mrf.mxu0
    %v1042 = vpop.f32.mrf.mxu0
    %v1043 = vadd.f32 %v819, %v1042
    %v1044 = vpop.f32.mrf.mxu0
    %1045 = vmatprep.mubr.bf16.mxu0 0
    %1046 = vmatmul.mubr.bf16.gmra.mxu0 %v113
    %v1047 = vpop.f32.mrf.mxu0
    %v1048 = vadd.f32 %v819, %v1047
    %v1049 = vpop.f32.mrf.mxu0
    %v1050 = vpop.f32.mrf.mxu0
    %v1051 = vadd.f32 %v819, %v1050
    %v1052 = vpop.f32.mrf.mxu0
    %1053 = vmatprep.mubr.bf16.mxu0 0
    %1054 = vmatmul.mubr.bf16.gmra.mxu0 %v114
    %v1055 = vpop.f32.mrf.mxu0
    %v1056 = vadd.f32 %v819, %v1055
    %v1057 = vpop.f32.mrf.mxu0
    %v1058 = vpop.f32.mrf.mxu0
    %v1059 = vadd.f32 %v819, %v1058
    %v1060 = vpop.f32.mrf.mxu0
    %1061 = vmatprep.mubr.bf16.mxu0 0
    %1062 = vmatmul.mubr.bf16.gmra.mxu0 %v115
    %v1063 = vpop.f32.mrf.mxu0
    %v1064 = vadd.f32 %v819, %v1063
    %v1065 = vpop.f32.mrf.mxu0
    %v1066 = vpop.f32.mrf.mxu0
    %v1067 = vadd.f32 %v819, %v1066
    %v1068 = vpop.f32.mrf.mxu0
    %1069 = vmatprep.mubr.bf16.mxu0 0
    %1070 = vmatmul.mubr.bf16.gmra.mxu0 %v116
    %v1071 = vpop.f32.mrf.mxu0
    %v1072 = vadd.f32 %v819, %v1071
    %v1073 = vpop.f32.mrf.mxu0
    %v1074 = vpop.f32.mrf.mxu0
    %v1075 = vadd.f32 %v819, %v1074
    %v1076 = vpop.f32.mrf.mxu0
    %1077 = vmatprep.mubr.bf16.mxu0 0
    %1078 = vmatmul.mubr.bf16.gmra.mxu0 %v117
    %v1079 = vpop.f32.mrf.mxu0
    %v1080 = vadd.f32 %v819, %v1079
    %v1081 = vpop.f32.mrf.mxu0
    %v1082 = vpop.f32.mrf.mxu0
    %v1083 = vadd.f32 %v819, %v1082
    %v1084 = vpop.f32.mrf.mxu0
    %1085 = vmatprep.mubr.bf16.mxu0 0
    %1086 = vmatmul.mubr.bf16.gmra.mxu0 %v118
    %v1087 = vpop.f32.mrf.mxu0
    %v1088 = vadd.f32 %v819, %v1087
    %v1089 = vpop.f32.mrf.mxu0
    %v1090 = vpop.f32.mrf.mxu0
    %v1091 = vadd.f32 %v819, %v1090
    %v1092 = vpop.f32.mrf.mxu0
    %1093 = vmatprep.mubr.bf16.mxu0 0
    %1094 = vmatmul.mubr.bf16.gmra.mxu0 %v119
    %v1095 = vpop.f32.mrf.mxu0
    %v1096 = vadd.f32 %v819, %v1095
    %v1097 = vpop.f32.mrf.mxu0
    %v1098 = vpop.f32.mrf.mxu0
    %v1099 = vadd.f32 %v819, %v1098
    %v1100 = vpop.f32.mrf.mxu0
    %1101 = vmatprep.mubr.bf16.mxu0 0
    %1102 = vmatmul.mubr.bf16.gmra.mxu0 %v120
    %v1103 = vpop.f32.mrf.mxu0
    %v1104 = vadd.f32 %v819, %v1103
    %v1105 = vpop.f32.mrf.mxu0
    %v1106 = vpop.f32.mrf.mxu0
    %v1107 = vadd.f32 %v819, %v1106
    %v1108 = vpop.f32.mrf.mxu0
    %1109 = vmatprep.mubr.bf16.mxu0 0
    %1110 = vmatmul.mubr.bf16.gmra.mxu0 %v121
    %v1111 = vpop.f32.mrf.mxu0
    %v1112 = vadd.f32 %v819, %v1111
    %v1113 = vpop.f32.mrf.mxu0
    %v1114 = vpop.f32.mrf.mxu0
    %v1115 = vadd.f32 %v819, %v1114
    %v1116 = vpop.f32.mrf.mxu0
    %1117 = vmatprep.mubr.bf16.mxu0 0
    %1118 = vmatmul.mubr.bf16.gmra.mxu0 %v122
    %v1119 = vpop.f32.mrf.mxu0
    %v1120 = vadd.f32 %v819, %v1119
    %v1121 = vpop.f32.mrf.mxu0
    %v1122 = vpop.f32.mrf.mxu0
    %v1123 = vadd.f32 %v819, %v1122
    %v1124 = vpop.f32.mrf.mxu0
    %1125 = vmatprep.mubr.bf16.mxu0 0
    %1126 = vmatmul.mubr.bf16.gmra.mxu0 %v123
    %v1127 = vpop.f32.mrf.mxu0
    %v1128 = vadd.f32 %v819, %v1127
    %v1129 = vpop.f32.mrf.mxu0
    %v1130 = vpop.f32.mrf.mxu0
    %v1131 = vadd.f32 %v819, %v1130
    %v1132 = vpop.f32.mrf.mxu0
    %1133 = vmatprep.mubr.bf16.mxu0 0
    %1134 = vmatmul.mubr.bf16.gmra.mxu0 %v124
    %v1135 = vpop.f32.mrf.mxu0
    %v1136 = vadd.f32 %v819, %v1135
    %v1137 = vpop.f32.mrf.mxu0
    %v1138 = vpop.f32.mrf.mxu0
    %v1139 = vadd.f32 %v819, %v1138
    %v1140 = vpop.f32.mrf.mxu0
    %1141 = vmatprep.mubr.bf16.mxu0 0
    %1142 = vmatmul.mubr.bf16.gmra.mxu0 %v125
    %v1143 = vpop.f32.mrf.mxu0
    %v1144 = vadd.f32 %v819, %v1143
    %v1145 = vpop.f32.mrf.mxu0
    %v1146 = vpop.f32.mrf.mxu0
    %v1147 = vadd.f32 %v819, %v1146
    %v1148 = vpop.f32.mrf.mxu0
    %1149 = vmatprep.mubr.bf16.mxu0 0
    %1150 = vmatmul.mubr.bf16.gmra.mxu0 %v126
    %v1151 = vpop.f32.mrf.mxu0
    %v1152 = vadd.f32 %v819, %v1151
    %v1153 = vpop.f32.mrf.mxu0
    %v1154 = vpop.f32.mrf.mxu0
    %v1155 = vadd.f32 %v819, %v1154
    %v1156 = vpop.f32.mrf.mxu0
    %1157 = vdwg.mxu0
    %v1158 = vmul.f32 %v904, %v734
    %v1159 = vmul.f32 %v907, %v735
    %v1160 = vmul.f32 %v912, %v736
    %v1161 = vmul.f32 %v915, %v737
    %v1162 = vmul.f32 %v920, %v738
    %v1163 = vmul.f32 %v923, %v739
    %v1164 = vmul.f32 %v928, %v740
    %v1165 = vmul.f32 %v931, %v741
    %v1166 = vmul.f32 %v936, %v742
    %v1167 = vmul.f32 %v939, %v743
    %v1168 = vmul.f32 %v944, %v744
    %v1169 = vmul.f32 %v947, %v745
    %v1170 = vmul.f32 %v952, %v746
    %v1171 = vmul.f32 %v955, %v747
    %v1172 = vmul.f32 %v960, %v748
    %v1173 = vmul.f32 %v963, %v749
    %v1174 = vmul.f32 %v968, %v750
    %v1175 = vmul.f32 %v971, %v751
    %v1176 = vmul.f32 %v976, %v752
    %v1177 = vmul.f32 %v979, %v753
    %v1178 = vmul.f32 %v984, %v754
    %v1179 = vmul.f32 %v987, %v755
    %v1180 = vmul.f32 %v992, %v756
    %v1181 = vmul.f32 %v995, %v757
    %v1182 = vmul.f32 %v1000, %v758
    %v1183 = vmul.f32 %v1003, %v759
    %v1184 = vmul.f32 %v1008, %v760
    %v1185 = vmul.f32 %v1011, %v761
    %v1186 = vmul.f32 %v1016, %v762
    %v1187 = vmul.f32 %v1019, %v763
    %v1188 = vmul.f32 %v1024, %v764
    %v1189 = vmul.f32 %v1027, %v765
    %v1190 = vmul.f32 %v1032, %v766
    %v1191 = vmul.f32 %v1035, %v767
    %v1192 = vmul.f32 %v1040, %v768
    %v1193 = vmul.f32 %v1043, %v769
    %v1194 = vmul.f32 %v1048, %v770
    %v1195 = vmul.f32 %v1051, %v771
    %v1196 = vmul.f32 %v1056, %v772
    %v1197 = vmul.f32 %v1059, %v773
    %v1198 = vmul.f32 %v1064, %v774
    %v1199 = vmul.f32 %v1067, %v775
    %v1200 = vmul.f32 %v1072, %v776
    %v1201 = vmul.f32 %v1075, %v777
    %v1202 = vmul.f32 %v1080, %v778
    %v1203 = vmul.f32 %v1083, %v779
    %v1204 = vmul.f32 %v1088, %v780
    %v1205 = vmul.f32 %v1091, %v781
    %v1206 = vmul.f32 %v1096, %v782
    %v1207 = vmul.f32 %v1099, %v783
    %v1208 = vmul.f32 %v1104, %v784
    %v1209 = vmul.f32 %v1107, %v785
    %v1210 = vmul.f32 %v1112, %v786
    %v1211 = vmul.f32 %v1115, %v787
    %v1212 = vmul.f32 %v1120, %v788
    %v1213 = vmul.f32 %v1123, %v789
    %v1214 = vmul.f32 %v1128, %v790
    %v1215 = vmul.f32 %v1131, %v791
    %v1216 = vmul.f32 %v1136, %v792
    %v1217 = vmul.f32 %v1139, %v793
    %v1218 = vmul.f32 %v1144, %v794
    %v1219 = vmul.f32 %v1147, %v795
    %v1220 = vmul.f32 %v1152, %v796
    %v1221 = vmul.f32 %v1155, %v797
    %v1222 = vadd.f32 %v1158, %v1159
    %v1223 = vadd.f32 %v1222, %v1160
    %v1224 = vadd.f32 %v1223, %v1161
    %v1225 = vadd.f32 %v1224, %v1162
    %v1226 = vadd.f32 %v1225, %v1163
    %v1227 = vadd.f32 %v1226, %v1164
    %v1228 = vadd.f32 %v1227, %v1165
    %v1229 = vrot.slane %v1228, 4
    %v1230 = vadd.f32 %v1228, %v1229
    %v1231 = vrot.slane %v1230, 2
    %v1232 = vadd.f32 %v1230, %v1231
    %v1233 = vrot.slane %v1232, 1
    %v1234 = vadd.f32 %v1232, %v1233
    %v1235 = vadd.f32 %v1166, %v1167
    %v1236 = vadd.f32 %v1235, %v1168
    %v1237 = vadd.f32 %v1236, %v1169
    %v1238 = vadd.f32 %v1237, %v1170
    %v1239 = vadd.f32 %v1238, %v1171
    %v1240 = vadd.f32 %v1239, %v1172
    %v1241 = vadd.f32 %v1240, %v1173
    %v1242 = vrot.slane %v1241, 4
    %v1243 = vadd.f32 %v1241, %v1242
    %v1244 = vrot.slane %v1243, 2
    %v1245 = vadd.f32 %v1243, %v1244
    %v1246 = vrot.slane %v1245, 1
    %v1247 = vadd.f32 %v1245, %v1246
    %v1248 = vadd.f32 %v1174, %v1175
    %v1249 = vadd.f32 %v1248, %v1176
    %v1250 = vadd.f32 %v1249, %v1177
    %v1251 = vadd.f32 %v1250, %v1178
    %v1252 = vadd.f32 %v1251, %v1179
    %v1253 = vadd.f32 %v1252, %v1180
    %v1254 = vadd.f32 %v1253, %v1181
    %v1255 = vrot.slane %v1254, 4
    %v1256 = vadd.f32 %v1254, %v1255
    %v1257 = vrot.slane %v1256, 2
    %v1258 = vadd.f32 %v1256, %v1257
    %v1259 = vrot.slane %v1258, 1
    %v1260 = vadd.f32 %v1258, %v1259
    %v1261 = vadd.f32 %v1182, %v1183
    %v1262 = vadd.f32 %v1261, %v1184
    %v1263 = vadd.f32 %v1262, %v1185
    %v1264 = vadd.f32 %v1263, %v1186
    %v1265 = vadd.f32 %v1264, %v1187
    %v1266 = vadd.f32 %v1265, %v1188
    %v1267 = vadd.f32 %v1266, %v1189
    %v1268 = vrot.slane %v1267, 4
    %v1269 = vadd.f32 %v1267, %v1268
    %v1270 = vrot.slane %v1269, 2
    %v1271 = vadd.f32 %v1269, %v1270
    %v1272 = vrot.slane %v1271, 1
    %v1273 = vadd.f32 %v1271, %v1272
    %v1274 = vadd.f32 %v1190, %v1191
    %v1275 = vadd.f32 %v1274, %v1192
    %v1276 = vadd.f32 %v1275, %v1193
    %v1277 = vadd.f32 %v1276, %v1194
    %v1278 = vadd.f32 %v1277, %v1195
    %v1279 = vadd.f32 %v1278, %v1196
    %v1280 = vadd.f32 %v1279, %v1197
    %v1281 = vrot.slane %v1280, 4
    %v1282 = vadd.f32 %v1280, %v1281
    %v1283 = vrot.slane %v1282, 2
    %v1284 = vadd.f32 %v1282, %v1283
    %v1285 = vrot.slane %v1284, 1
    %v1286 = vadd.f32 %v1284, %v1285
    %v1287 = vadd.f32 %v1198, %v1199
    %v1288 = vadd.f32 %v1287, %v1200
    %v1289 = vadd.f32 %v1288, %v1201
    %v1290 = vadd.f32 %v1289, %v1202
    %v1291 = vadd.f32 %v1290, %v1203
    %v1292 = vadd.f32 %v1291, %v1204
    %v1293 = vadd.f32 %v1292, %v1205
    %v1294 = vrot.slane %v1293, 4
    %v1295 = vadd.f32 %v1293, %v1294
    %v1296 = vrot.slane %v1295, 2
    %v1297 = vadd.f32 %v1295, %v1296
    %v1298 = vrot.slane %v1297, 1
    %v1299 = vadd.f32 %v1297, %v1298
    %v1300 = vadd.f32 %v1206, %v1207
    %v1301 = vadd.f32 %v1300, %v1208
    %v1302 = vadd.f32 %v1301, %v1209
    %v1303 = vadd.f32 %v1302, %v1210
    %v1304 = vadd.f32 %v1303, %v1211
    %v1305 = vadd.f32 %v1304, %v1212
    %v1306 = vadd.f32 %v1305, %v1213
    %v1307 = vrot.slane %v1306, 4
    %v1308 = vadd.f32 %v1306, %v1307
    %v1309 = vrot.slane %v1308, 2
    %v1310 = vadd.f32 %v1308, %v1309
    %v1311 = vrot.slane %v1310, 1
    %v1312 = vadd.f32 %v1310, %v1311
    %v1313 = vadd.f32 %v1214, %v1215
    %v1314 = vadd.f32 %v1313, %v1216
    %v1315 = vadd.f32 %v1314, %v1217
    %v1316 = vadd.f32 %v1315, %v1218
    %v1317 = vadd.f32 %v1316, %v1219
    %v1318 = vadd.f32 %v1317, %v1220
    %v1319 = vadd.f32 %v1318, %v1221
    %v1320 = vrot.slane %v1319, 4
    %v1321 = vadd.f32 %v1319, %v1320
    %v1322 = vrot.slane %v1321, 2
    %v1323 = vadd.f32 %v1321, %v1322
    %v1324 = vrot.slane %v1323, 1
    %v1325 = vadd.f32 %v1323, %v1324
    %v1326 = vld [vmem:[%s4] sm:$0xf]
    %v1327 = vld [vmem:[%s4 + $0x4] sm:$0xf]
    %v1328 = vld [vmem:[%s4 + $0x8] sm:$0xf]
    %v1329 = vld [vmem:[%s4 + $0xc] sm:$0xf]
    %v1330 = vld [vmem:[%s4 + $0x10] sm:$0xf]
    %v1331 = vld [vmem:[%s4 + $0x14] sm:$0xf]
    %v1332 = vld [vmem:[%s4 + $0x18] sm:$0xf]
    %v1333 = vld [vmem:[%s4 + $0x1c] sm:$0xf]
    %v1334 = vld [vmem:[%s4 + $0x20] sm:$0xf]
    %v1335 = vld [vmem:[%s4 + $0x24] sm:$0xf]
    %v1336 = vld [vmem:[%s4 + $0x28] sm:$0xf]
    %v1337 = vld [vmem:[%s4 + $0x2c] sm:$0xf]
    %v1338 = vld [vmem:[%s4 + $0x30] sm:$0xf]
    %v1339 = vld [vmem:[%s4 + $0x34] sm:$0xf]
    %v1340 = vld [vmem:[%s4 + $0x38] sm:$0xf]
    %v1341 = vld [vmem:[%s4 + $0x3c] sm:$0xf]
    %v1342 = vld [vmem:[%s5] sm:$0x1]
    %v1344 = vlaneseq
    %v1345 = vshrl.u32 %v1344, 7
    %v1346 = vsub.s32 0, %v1345
    %v1347 = vrot.slane %v1342, %v1346
    %v1365 = vunpack.c.l.b16 %v1326
    %v1366 = vunpack.c.l.b16 %v1327
    %v1367 = vunpack.c.l.b16 %v1328
    %v1368 = vunpack.c.l.b16 %v1329
    %v1369 = vunpack.c.l.b16 %v1330
    %v1370 = vunpack.c.l.b16 %v1331
    %v1371 = vunpack.c.l.b16 %v1332
    %v1372 = vunpack.c.l.b16 %v1333
    %v1373 = vunpack.c.l.b16 %v1334
    %v1374 = vunpack.c.l.b16 %v1335
    %v1375 = vunpack.c.l.b16 %v1336
    %v1376 = vunpack.c.l.b16 %v1337
    %v1377 = vunpack.c.l.b16 %v1338
    %v1378 = vunpack.c.l.b16 %v1339
    %v1379 = vunpack.c.l.b16 %v1340
    %v1380 = vunpack.c.l.b16 %v1341
    %v1381 = vpack.c.b16 %v1366, %v1365
    %v1382 = vpack.c.b16 %v1368, %v1367
    %v1383 = vpack.c.b16 %v1370, %v1369
    %v1384 = vpack.c.b16 %v1372, %v1371
    %v1385 = vpack.c.b16 %v1374, %v1373
    %v1386 = vpack.c.b16 %v1376, %v1375
    %v1387 = vpack.c.b16 %v1378, %v1377
    %v1388 = vpack.c.b16 %v1380, %v1379
    %1397 = vmatprep.subr.bf16.mxu0 0
    %1398 = vmatpush1.bf16.msra.mxu0 %v1388
    %1399 = vmatprep.subr.bf16.mxu0 0
    %1400 = vmatpush1.bf16.msra.mxu0 %v1387
    %1401 = vmatprep.subr.bf16.mxu0 0
    %1402 = vmatpush1.bf16.msra.mxu0 %v1386
    %1403 = vmatprep.subr.bf16.mxu0 0
    %1404 = vmatpush1.bf16.msra.mxu0 %v1385
    %1405 = vmatprep.subr.bf16.mxu0 0
    %1406 = vmatpush1.bf16.msra.mxu0 %v1384
    %1407 = vmatprep.subr.bf16.mxu0 0
    %1408 = vmatpush1.bf16.msra.mxu0 %v1383
    %1409 = vmatprep.subr.bf16.mxu0 0
    %1410 = vmatpush1.bf16.msra.mxu0 %v1382
    %1411 = vmatprep.subr.bf16.mxu0 0
    %1412 = vmatpush1.bf16.msra.mxu0 %v1381
    %1413 = vmatprep.subr.bf16.mxu0 0
    %1414 = vmatpush2.bf16.msra.mxu0 0
    %1415 = vmatprep.subr.bf16.mxu0 0
    %1416 = vmatpush2.bf16.msra.mxu0 0
    %1417 = vmatprep.subr.bf16.mxu0 0
    %1418 = vmatpush2.bf16.msra.mxu0 0
    %1419 = vmatprep.subr.bf16.mxu0 0
    %1420 = vmatpush2.bf16.msra.mxu0 0
    %1421 = vmatprep.subr.bf16.mxu0 0
    %1422 = vmatpush2.bf16.msra.mxu0 0
    %1423 = vmatprep.subr.bf16.mxu0 0
    %1424 = vmatpush2.bf16.msra.mxu0 0
    %1425 = vmatprep.subr.bf16.mxu0 0
    %1426 = vmatpush2.bf16.msra.mxu0 0
    %1427 = vmatprep.subr.bf16.mxu0 0
    %1428 = vmatpush2.bf16.msra.mxu0 0
    %1429 = vmatprep.mubr.bf16.mxu0 0
    %1430 = vmatmul.mubr.bf16.gmra.mxu0 %v95
    %v1431 = vpop.f32.mrf.mxu0
    %v1432 = vadd.f32 %v1347, %v1431
    %v1433 = vpop.f32.mrf.mxu0
    %v1434 = vpop.f32.mrf.mxu0
    %v1435 = vadd.f32 %v1347, %v1434
    %v1436 = vpop.f32.mrf.mxu0
    %1437 = vmatprep.mubr.bf16.mxu0 0
    %1438 = vmatmul.mubr.bf16.gmra.mxu0 %v96
    %v1439 = vpop.f32.mrf.mxu0
    %v1440 = vadd.f32 %v1347, %v1439
    %v1441 = vpop.f32.mrf.mxu0
    %v1442 = vpop.f32.mrf.mxu0
    %v1443 = vadd.f32 %v1347, %v1442
    %v1444 = vpop.f32.mrf.mxu0
    %1445 = vmatprep.mubr.bf16.mxu0 0
    %1446 = vmatmul.mubr.bf16.gmra.mxu0 %v97
    %v1447 = vpop.f32.mrf.mxu0
    %v1448 = vadd.f32 %v1347, %v1447
    %v1449 = vpop.f32.mrf.mxu0
    %v1450 = vpop.f32.mrf.mxu0
    %v1451 = vadd.f32 %v1347, %v1450
    %v1452 = vpop.f32.mrf.mxu0
    %1453 = vmatprep.mubr.bf16.mxu0 0
    %1454 = vmatmul.mubr.bf16.gmra.mxu0 %v98
    %v1455 = vpop.f32.mrf.mxu0
    %v1456 = vadd.f32 %v1347, %v1455
    %v1457 = vpop.f32.mrf.mxu0
    %v1458 = vpop.f32.mrf.mxu0
    %v1459 = vadd.f32 %v1347, %v1458
    %v1460 = vpop.f32.mrf.mxu0
    %1461 = vmatprep.mubr.bf16.mxu0 0
    %1462 = vmatmul.mubr.bf16.gmra.mxu0 %v99
    %v1463 = vpop.f32.mrf.mxu0
    %v1464 = vadd.f32 %v1347, %v1463
    %v1465 = vpop.f32.mrf.mxu0
    %v1466 = vpop.f32.mrf.mxu0
    %v1467 = vadd.f32 %v1347, %v1466
    %v1468 = vpop.f32.mrf.mxu0
    %1469 = vmatprep.mubr.bf16.mxu0 0
    %1470 = vmatmul.mubr.bf16.gmra.mxu0 %v100
    %v1471 = vpop.f32.mrf.mxu0
    %v1472 = vadd.f32 %v1347, %v1471
    %v1473 = vpop.f32.mrf.mxu0
    %v1474 = vpop.f32.mrf.mxu0
    %v1475 = vadd.f32 %v1347, %v1474
    %v1476 = vpop.f32.mrf.mxu0
    %1477 = vmatprep.mubr.bf16.mxu0 0
    %1478 = vmatmul.mubr.bf16.gmra.mxu0 %v101
    %v1479 = vpop.f32.mrf.mxu0
    %v1480 = vadd.f32 %v1347, %v1479
    %v1481 = vpop.f32.mrf.mxu0
    %v1482 = vpop.f32.mrf.mxu0
    %v1483 = vadd.f32 %v1347, %v1482
    %v1484 = vpop.f32.mrf.mxu0
    %1485 = vmatprep.mubr.bf16.mxu0 0
    %1486 = vmatmul.mubr.bf16.gmra.mxu0 %v102
    %v1487 = vpop.f32.mrf.mxu0
    %v1488 = vadd.f32 %v1347, %v1487
    %v1489 = vpop.f32.mrf.mxu0
    %v1490 = vpop.f32.mrf.mxu0
    %v1491 = vadd.f32 %v1347, %v1490
    %v1492 = vpop.f32.mrf.mxu0
    %1493 = vmatprep.mubr.bf16.mxu0 0
    %1494 = vmatmul.mubr.bf16.gmra.mxu0 %v103
    %v1495 = vpop.f32.mrf.mxu0
    %v1496 = vadd.f32 %v1347, %v1495
    %v1497 = vpop.f32.mrf.mxu0
    %v1498 = vpop.f32.mrf.mxu0
    %v1499 = vadd.f32 %v1347, %v1498
    %v1500 = vpop.f32.mrf.mxu0
    %1501 = vmatprep.mubr.bf16.mxu0 0
    %1502 = vmatmul.mubr.bf16.gmra.mxu0 %v104
    %v1503 = vpop.f32.mrf.mxu0
    %v1504 = vadd.f32 %v1347, %v1503
    %v1505 = vpop.f32.mrf.mxu0
    %v1506 = vpop.f32.mrf.mxu0
    %v1507 = vadd.f32 %v1347, %v1506
    %v1508 = vpop.f32.mrf.mxu0
    %1509 = vmatprep.mubr.bf16.mxu0 0
    %1510 = vmatmul.mubr.bf16.gmra.mxu0 %v105
    %v1511 = vpop.f32.mrf.mxu0
    %v1512 = vadd.f32 %v1347, %v1511
    %v1513 = vpop.f32.mrf.mxu0
    %v1514 = vpop.f32.mrf.mxu0
    %v1515 = vadd.f32 %v1347, %v1514
    %v1516 = vpop.f32.mrf.mxu0
    %1517 = vmatprep.mubr.bf16.mxu0 0
    %1518 = vmatmul.mubr.bf16.gmra.mxu0 %v106
    %v1519 = vpop.f32.mrf.mxu0
    %v1520 = vadd.f32 %v1347, %v1519
    %v1521 = vpop.f32.mrf.mxu0
    %v1522 = vpop.f32.mrf.mxu0
    %v1523 = vadd.f32 %v1347, %v1522
    %v1524 = vpop.f32.mrf.mxu0
    %1525 = vmatprep.mubr.bf16.mxu0 0
    %1526 = vmatmul.mubr.bf16.gmra.mxu0 %v107
    %v1527 = vpop.f32.mrf.mxu0
    %v1528 = vadd.f32 %v1347, %v1527
    %v1529 = vpop.f32.mrf.mxu0
    %v1530 = vpop.f32.mrf.mxu0
    %v1531 = vadd.f32 %v1347, %v1530
    %v1532 = vpop.f32.mrf.mxu0
    %1533 = vmatprep.mubr.bf16.mxu0 0
    %1534 = vmatmul.mubr.bf16.gmra.mxu0 %v108
    %v1535 = vpop.f32.mrf.mxu0
    %v1536 = vadd.f32 %v1347, %v1535
    %v1537 = vpop.f32.mrf.mxu0
    %v1538 = vpop.f32.mrf.mxu0
    %v1539 = vadd.f32 %v1347, %v1538
    %v1540 = vpop.f32.mrf.mxu0
    %1541 = vmatprep.mubr.bf16.mxu0 0
    %1542 = vmatmul.mubr.bf16.gmra.mxu0 %v109
    %v1543 = vpop.f32.mrf.mxu0
    %v1544 = vadd.f32 %v1347, %v1543
    %v1545 = vpop.f32.mrf.mxu0
    %v1546 = vpop.f32.mrf.mxu0
    %v1547 = vadd.f32 %v1347, %v1546
    %v1548 = vpop.f32.mrf.mxu0
    %1549 = vmatprep.mubr.bf16.mxu0 0
    %1550 = vmatmul.mubr.bf16.gmra.mxu0 %v110
    %v1551 = vpop.f32.mrf.mxu0
    %v1552 = vadd.f32 %v1347, %v1551
    %v1553 = vpop.f32.mrf.mxu0
    %v1554 = vpop.f32.mrf.mxu0
    %v1555 = vadd.f32 %v1347, %v1554
    %v1556 = vpop.f32.mrf.mxu0
    %1557 = vmatprep.mubr.bf16.mxu0 0
    %1558 = vmatmul.mubr.bf16.gmra.mxu0 %v111
    %v1559 = vpop.f32.mrf.mxu0
    %v1560 = vadd.f32 %v1347, %v1559
    %v1561 = vpop.f32.mrf.mxu0
    %v1562 = vpop.f32.mrf.mxu0
    %v1563 = vadd.f32 %v1347, %v1562
    %v1564 = vpop.f32.mrf.mxu0
    %1565 = vmatprep.mubr.bf16.mxu0 0
    %1566 = vmatmul.mubr.bf16.gmra.mxu0 %v112
    %v1567 = vpop.f32.mrf.mxu0
    %v1568 = vadd.f32 %v1347, %v1567
    %v1569 = vpop.f32.mrf.mxu0
    %v1570 = vpop.f32.mrf.mxu0
    %v1571 = vadd.f32 %v1347, %v1570
    %v1572 = vpop.f32.mrf.mxu0
    %1573 = vmatprep.mubr.bf16.mxu0 0
    %1574 = vmatmul.mubr.bf16.gmra.mxu0 %v113
    %v1575 = vpop.f32.mrf.mxu0
    %v1576 = vadd.f32 %v1347, %v1575
    %v1577 = vpop.f32.mrf.mxu0
    %v1578 = vpop.f32.mrf.mxu0
    %v1579 = vadd.f32 %v1347, %v1578
    %v1580 = vpop.f32.mrf.mxu0
    %1581 = vmatprep.mubr.bf16.mxu0 0
    %1582 = vmatmul.mubr.bf16.gmra.mxu0 %v114
    %v1583 = vpop.f32.mrf.mxu0
    %v1584 = vadd.f32 %v1347, %v1583
    %v1585 = vpop.f32.mrf.mxu0
    %v1586 = vpop.f32.mrf.mxu0
    %v1587 = vadd.f32 %v1347, %v1586
    %v1588 = vpop.f32.mrf.mxu0
    %1589 = vmatprep.mubr.bf16.mxu0 0
    %1590 = vmatmul.mubr.bf16.gmra.mxu0 %v115
    %v1591 = vpop.f32.mrf.mxu0
    %v1592 = vadd.f32 %v1347, %v1591
    %v1593 = vpop.f32.mrf.mxu0
    %v1594 = vpop.f32.mrf.mxu0
    %v1595 = vadd.f32 %v1347, %v1594
    %v1596 = vpop.f32.mrf.mxu0
    %1597 = vmatprep.mubr.bf16.mxu0 0
    %1598 = vmatmul.mubr.bf16.gmra.mxu0 %v116
    %v1599 = vpop.f32.mrf.mxu0
    %v1600 = vadd.f32 %v1347, %v1599
    %v1601 = vpop.f32.mrf.mxu0
    %v1602 = vpop.f32.mrf.mxu0
    %v1603 = vadd.f32 %v1347, %v1602
    %v1604 = vpop.f32.mrf.mxu0
    %1605 = vmatprep.mubr.bf16.mxu0 0
    %1606 = vmatmul.mubr.bf16.gmra.mxu0 %v117
    %v1607 = vpop.f32.mrf.mxu0
    %v1608 = vadd.f32 %v1347, %v1607
    %v1609 = vpop.f32.mrf.mxu0
    %v1610 = vpop.f32.mrf.mxu0
    %v1611 = vadd.f32 %v1347, %v1610
    %v1612 = vpop.f32.mrf.mxu0
    %1613 = vmatprep.mubr.bf16.mxu0 0
    %1614 = vmatmul.mubr.bf16.gmra.mxu0 %v118
    %v1615 = vpop.f32.mrf.mxu0
    %v1616 = vadd.f32 %v1347, %v1615
    %v1617 = vpop.f32.mrf.mxu0
    %v1618 = vpop.f32.mrf.mxu0
    %v1619 = vadd.f32 %v1347, %v1618
    %v1620 = vpop.f32.mrf.mxu0
    %1621 = vmatprep.mubr.bf16.mxu0 0
    %1622 = vmatmul.mubr.bf16.gmra.mxu0 %v119
    %v1623 = vpop.f32.mrf.mxu0
    %v1624 = vadd.f32 %v1347, %v1623
    %v1625 = vpop.f32.mrf.mxu0
    %v1626 = vpop.f32.mrf.mxu0
    %v1627 = vadd.f32 %v1347, %v1626
    %v1628 = vpop.f32.mrf.mxu0
    %1629 = vmatprep.mubr.bf16.mxu0 0
    %1630 = vmatmul.mubr.bf16.gmra.mxu0 %v120
    %v1631 = vpop.f32.mrf.mxu0
    %v1632 = vadd.f32 %v1347, %v1631
    %v1633 = vpop.f32.mrf.mxu0
    %v1634 = vpop.f32.mrf.mxu0
    %v1635 = vadd.f32 %v1347, %v1634
    %v1636 = vpop.f32.mrf.mxu0
    %1637 = vmatprep.mubr.bf16.mxu0 0
    %1638 = vmatmul.mubr.bf16.gmra.mxu0 %v121
    %v1639 = vpop.f32.mrf.mxu0
    %v1640 = vadd.f32 %v1347, %v1639
    %v1641 = vpop.f32.mrf.mxu0
    %v1642 = vpop.f32.mrf.mxu0
    %v1643 = vadd.f32 %v1347, %v1642
    %v1644 = vpop.f32.mrf.mxu0
    %1645 = vmatprep.mubr.bf16.mxu0 0
    %1646 = vmatmul.mubr.bf16.gmra.mxu0 %v122
    %v1647 = vpop.f32.mrf.mxu0
    %v1648 = vadd.f32 %v1347, %v1647
    %v1649 = vpop.f32.mrf.mxu0
    %v1650 = vpop.f32.mrf.mxu0
    %v1651 = vadd.f32 %v1347, %v1650
    %v1652 = vpop.f32.mrf.mxu0
    %1653 = vmatprep.mubr.bf16.mxu0 0
    %1654 = vmatmul.mubr.bf16.gmra.mxu0 %v123
    %v1655 = vpop.f32.mrf.mxu0
    %v1656 = vadd.f32 %v1347, %v1655
    %v1657 = vpop.f32.mrf.mxu0
    %v1658 = vpop.f32.mrf.mxu0
    %v1659 = vadd.f32 %v1347, %v1658
    %v1660 = vpop.f32.mrf.mxu0
    %1661 = vmatprep.mubr.bf16.mxu0 0
    %1662 = vmatmul.mubr.bf16.gmra.mxu0 %v124
    %v1663 = vpop.f32.mrf.mxu0
    %v1664 = vadd.f32 %v1347, %v1663
    %v1665 = vpop.f32.mrf.mxu0
    %v1666 = vpop.f32.mrf.mxu0
    %v1667 = vadd.f32 %v1347, %v1666
    %v1668 = vpop.f32.mrf.mxu0
    %1669 = vmatprep.mubr.bf16.mxu0 0
    %1670 = vmatmul.mubr.bf16.gmra.mxu0 %v125
    %v1671 = vpop.f32.mrf.mxu0
    %v1672 = vadd.f32 %v1347, %v1671
    %v1673 = vpop.f32.mrf.mxu0
    %v1674 = vpop.f32.mrf.mxu0
    %v1675 = vadd.f32 %v1347, %v1674
    %v1676 = vpop.f32.mrf.mxu0
    %1677 = vmatprep.mubr.bf16.mxu0 0
    %1678 = vmatmul.mubr.bf16.gmra.mxu0 %v126
    %v1679 = vpop.f32.mrf.mxu0
    %v1680 = vadd.f32 %v1347, %v1679
    %v1681 = vpop.f32.mrf.mxu0
    %v1682 = vpop.f32.mrf.mxu0
    %v1683 = vadd.f32 %v1347, %v1682
    %v1684 = vpop.f32.mrf.mxu0
    %1685 = vdwg.mxu0
    %v1686 = vmax.f32 %v1432, 0.0
    %v1687 = vmax.f32 %v1435, 0.0
    %v1688 = vmax.f32 %v1440, 0.0
    %v1689 = vmax.f32 %v1443, 0.0
    %v1690 = vmax.f32 %v1448, 0.0
    %v1691 = vmax.f32 %v1451, 0.0
    %v1692 = vmax.f32 %v1456, 0.0
    %v1693 = vmax.f32 %v1459, 0.0
    %v1694 = vmax.f32 %v1464, 0.0
    %v1695 = vmax.f32 %v1467, 0.0
    %v1696 = vmax.f32 %v1472, 0.0
    %v1697 = vmax.f32 %v1475, 0.0
    %v1698 = vmax.f32 %v1480, 0.0
    %v1699 = vmax.f32 %v1483, 0.0
    %v1700 = vmax.f32 %v1488, 0.0
    %v1701 = vmax.f32 %v1491, 0.0
    %v1702 = vmax.f32 %v1496, 0.0
    %v1703 = vmax.f32 %v1499, 0.0
    %v1704 = vmax.f32 %v1504, 0.0
    %v1705 = vmax.f32 %v1507, 0.0
    %v1706 = vmax.f32 %v1512, 0.0
    %v1707 = vmax.f32 %v1515, 0.0
    %v1708 = vmax.f32 %v1520, 0.0
    %v1709 = vmax.f32 %v1523, 0.0
    %v1710 = vmax.f32 %v1528, 0.0
    %v1711 = vmax.f32 %v1531, 0.0
    %v1712 = vmax.f32 %v1536, 0.0
    %v1713 = vmax.f32 %v1539, 0.0
    %v1714 = vmax.f32 %v1544, 0.0
    %v1715 = vmax.f32 %v1547, 0.0
    %v1716 = vmax.f32 %v1552, 0.0
    %v1717 = vmax.f32 %v1555, 0.0
    %v1718 = vmax.f32 %v1560, 0.0
    %v1719 = vmax.f32 %v1563, 0.0
    %v1720 = vmax.f32 %v1568, 0.0
    %v1721 = vmax.f32 %v1571, 0.0
    %v1722 = vmax.f32 %v1576, 0.0
    %v1723 = vmax.f32 %v1579, 0.0
    %v1724 = vmax.f32 %v1584, 0.0
    %v1725 = vmax.f32 %v1587, 0.0
    %v1726 = vmax.f32 %v1592, 0.0
    %v1727 = vmax.f32 %v1595, 0.0
    %v1728 = vmax.f32 %v1600, 0.0
    %v1729 = vmax.f32 %v1603, 0.0
    %v1730 = vmax.f32 %v1608, 0.0
    %v1731 = vmax.f32 %v1611, 0.0
    %v1732 = vmax.f32 %v1616, 0.0
    %v1733 = vmax.f32 %v1619, 0.0
    %v1734 = vmax.f32 %v1624, 0.0
    %v1735 = vmax.f32 %v1627, 0.0
    %v1736 = vmax.f32 %v1632, 0.0
    %v1737 = vmax.f32 %v1635, 0.0
    %v1738 = vmax.f32 %v1640, 0.0
    %v1739 = vmax.f32 %v1643, 0.0
    %v1740 = vmax.f32 %v1648, 0.0
    %v1741 = vmax.f32 %v1651, 0.0
    %v1742 = vmax.f32 %v1656, 0.0
    %v1743 = vmax.f32 %v1659, 0.0
    %v1744 = vmax.f32 %v1664, 0.0
    %v1745 = vmax.f32 %v1667, 0.0
    %v1746 = vmax.f32 %v1672, 0.0
    %v1747 = vmax.f32 %v1675, 0.0
    %v1748 = vmax.f32 %v1680, 0.0
    %v1749 = vmax.f32 %v1683, 0.0
    %v1750 = vmul.f32 %v1686, %v1234
    %v1751 = vmul.f32 %v1687, %v1234
    %v1752 = vmul.f32 %v1688, %v1234
    %v1753 = vmul.f32 %v1689, %v1234
    %v1754 = vmul.f32 %v1690, %v1234
    %v1755 = vmul.f32 %v1691, %v1234
    %v1756 = vmul.f32 %v1692, %v1234
    %v1757 = vmul.f32 %v1693, %v1234
    %v1758 = vmul.f32 %v1694, %v1247
    %v1759 = vmul.f32 %v1695, %v1247
    %v1760 = vmul.f32 %v1696, %v1247
    %v1761 = vmul.f32 %v1697, %v1247
    %v1762 = vmul.f32 %v1698, %v1247
    %v1763 = vmul.f32 %v1699, %v1247
    %v1764 = vmul.f32 %v1700, %v1247
    %v1765 = vmul.f32 %v1701, %v1247
    %v1766 = vmul.f32 %v1702, %v1260
    %v1767 = vmul.f32 %v1703, %v1260
    %v1768 = vmul.f32 %v1704, %v1260
    %v1769 = vmul.f32 %v1705, %v1260
    %v1770 = vmul.f32 %v1706, %v1260
    %v1771 = vmul.f32 %v1707, %v1260
    %v1772 = vmul.f32 %v1708, %v1260
    %v1773 = vmul.f32 %v1709, %v1260
    %v1774 = vmul.f32 %v1710, %v1273
    %v1775 = vmul.f32 %v1711, %v1273
    %v1776 = vmul.f32 %v1712, %v1273
    %v1777 = vmul.f32 %v1713, %v1273
    %v1778 = vmul.f32 %v1714, %v1273
    %v1779 = vmul.f32 %v1715, %v1273
    %v1780 = vmul.f32 %v1716, %v1273
    %v1781 = vmul.f32 %v1717, %v1273
    %v1782 = vmul.f32 %v1718, %v1286
    %v1783 = vmul.f32 %v1719, %v1286
    %v1784 = vmul.f32 %v1720, %v1286
    %v1785 = vmul.f32 %v1721, %v1286
    %v1786 = vmul.f32 %v1722, %v1286
    %v1787 = vmul.f32 %v1723, %v1286
    %v1788 = vmul.f32 %v1724, %v1286
    %v1789 = vmul.f32 %v1725, %v1286
    %v1790 = vmul.f32 %v1726, %v1299
    %v1791 = vmul.f32 %v1727, %v1299
    %v1792 = vmul.f32 %v1728, %v1299
    %v1793 = vmul.f32 %v1729, %v1299
    %v1794 = vmul.f32 %v1730, %v1299
    %v1795 = vmul.f32 %v1731, %v1299
    %v1796 = vmul.f32 %v1732, %v1299
    %v1797 = vmul.f32 %v1733, %v1299
    %v1798 = vmul.f32 %v1734, %v1312
    %v1799 = vmul.f32 %v1735, %v1312
    %v1800 = vmul.f32 %v1736, %v1312
    %v1801 = vmul.f32 %v1737, %v1312
    %v1802 = vmul.f32 %v1738, %v1312
    %v1803 = vmul.f32 %v1739, %v1312
    %v1804 = vmul.f32 %v1740, %v1312
    %v1805 = vmul.f32 %v1741, %v1312
    %v1806 = vmul.f32 %v1742, %v1325
    %v1807 = vmul.f32 %v1743, %v1325
    %v1808 = vmul.f32 %v1744, %v1325
    %v1809 = vmul.f32 %v1745, %v1325
    %v1810 = vmul.f32 %v1746, %v1325
    %v1811 = vmul.f32 %v1747, %v1325
    %v1812 = vmul.f32 %v1748, %v1325
    %v1813 = vmul.f32 %v1749, %v1325
    %v1814 = vpack.c.bf16 %v1751, %v1750
    %v1815 = vpack.c.bf16 %v1753, %v1752
    %v1816 = vpack.c.bf16 %v1755, %v1754
    %v1817 = vpack.c.bf16 %v1757, %v1756
    %v1818 = vpack.c.bf16 %v1759, %v1758
    %v1819 = vpack.c.bf16 %v1761, %v1760
    %v1820 = vpack.c.bf16 %v1763, %v1762
    %v1821 = vpack.c.bf16 %v1765, %v1764
    %v1822 = vpack.c.bf16 %v1767, %v1766
    %v1823 = vpack.c.bf16 %v1769, %v1768
    %v1824 = vpack.c.bf16 %v1771, %v1770
    %v1825 = vpack.c.bf16 %v1773, %v1772
    %v1826 = vpack.c.bf16 %v1775, %v1774
    %v1827 = vpack.c.bf16 %v1777, %v1776
    %v1828 = vpack.c.bf16 %v1779, %v1778
    %v1829 = vpack.c.bf16 %v1781, %v1780
    %v1830 = vpack.c.bf16 %v1783, %v1782
    %v1831 = vpack.c.bf16 %v1785, %v1784
    %v1832 = vpack.c.bf16 %v1787, %v1786
    %v1833 = vpack.c.bf16 %v1789, %v1788
    %v1834 = vpack.c.bf16 %v1791, %v1790
    %v1835 = vpack.c.bf16 %v1793, %v1792
    %v1836 = vpack.c.bf16 %v1795, %v1794
    %v1837 = vpack.c.bf16 %v1797, %v1796
    %v1838 = vpack.c.bf16 %v1799, %v1798
    %v1839 = vpack.c.bf16 %v1801, %v1800
    %v1840 = vpack.c.bf16 %v1803, %v1802
    %v1841 = vpack.c.bf16 %v1805, %v1804
    %v1842 = vpack.c.bf16 %v1807, %v1806
    %v1843 = vpack.c.bf16 %v1809, %v1808
    %v1844 = vpack.c.bf16 %v1811, %v1810
    %v1845 = vpack.c.bf16 %v1813, %v1812
    %v1846 = vld [vmem:[%s6] sm:$0xf]
    %v1847 = vld [vmem:[%s6 + $0x4] sm:$0xf]
    %v1848 = vld [vmem:[%s6 + $0x8] sm:$0xf]
    %v1849 = vld [vmem:[%s6 + $0xc] sm:$0xf]
    %v1850 = vld [vmem:[%s6 + $0x10] sm:$0xf]
    %v1851 = vld [vmem:[%s6 + $0x14] sm:$0xf]
    %v1852 = vld [vmem:[%s6 + $0x18] sm:$0xf]
    %v1853 = vld [vmem:[%s6 + $0x1c] sm:$0xf]
    %v1854 = vld [vmem:[%s6 + $0x20] sm:$0xf]
    %v1855 = vld [vmem:[%s6 + $0x24] sm:$0xf]
    %v1856 = vld [vmem:[%s6 + $0x28] sm:$0xf]
    %v1857 = vld [vmem:[%s6 + $0x2c] sm:$0xf]
    %v1858 = vld [vmem:[%s6 + $0x30] sm:$0xf]
    %v1859 = vld [vmem:[%s6 + $0x34] sm:$0xf]
    %v1860 = vld [vmem:[%s6 + $0x38] sm:$0xf]
    %v1861 = vld [vmem:[%s6 + $0x3c] sm:$0xf]
    %v1862 = vld [vmem:[%s7] sm:$0x1]
    %v1864 = vlaneseq
    %v1865 = vshrl.u32 %v1864, 7
    %v1866 = vsub.s32 0, %v1865
    %v1867 = vrot.slane %v1862, %v1866
    %v1885 = vunpack.c.l.b16 %v1846
    %v1886 = vunpack.c.l.b16 %v1847
    %v1887 = vunpack.c.l.b16 %v1848
    %v1888 = vunpack.c.l.b16 %v1849
    %v1889 = vunpack.c.l.b16 %v1850
    %v1890 = vunpack.c.l.b16 %v1851
    %v1891 = vunpack.c.l.b16 %v1852
    %v1892 = vunpack.c.l.b16 %v1853
    %v1893 = vunpack.c.l.b16 %v1854
    %v1894 = vunpack.c.l.b16 %v1855
    %v1895 = vunpack.c.l.b16 %v1856
    %v1896 = vunpack.c.l.b16 %v1857
    %v1897 = vunpack.c.l.b16 %v1858
    %v1898 = vunpack.c.l.b16 %v1859
    %v1899 = vunpack.c.l.b16 %v1860
    %v1900 = vunpack.c.l.b16 %v1861
    %v1901 = vpack.c.b16 %v1886, %v1885
    %v1902 = vpack.c.b16 %v1888, %v1887
    %v1903 = vpack.c.b16 %v1890, %v1889
    %v1904 = vpack.c.b16 %v1892, %v1891
    %v1905 = vpack.c.b16 %v1894, %v1893
    %v1906 = vpack.c.b16 %v1896, %v1895
    %v1907 = vpack.c.b16 %v1898, %v1897
    %v1908 = vpack.c.b16 %v1900, %v1899
    %1917 = vmatprep.subr.bf16.mxu0 0
    %1918 = vmatpush1.bf16.msra.mxu0 %v1908
    %1919 = vmatprep.subr.bf16.mxu0 0
    %1920 = vmatpush1.bf16.msra.mxu0 %v1907
    %1921 = vmatprep.subr.bf16.mxu0 0
    %1922 = vmatpush1.bf16.msra.mxu0 %v1906
    %1923 = vmatprep.subr.bf16.mxu0 0
    %1924 = vmatpush1.bf16.msra.mxu0 %v1905
    %1925 = vmatprep.subr.bf16.mxu0 0
    %1926 = vmatpush1.bf16.msra.mxu0 %v1904
    %1927 = vmatprep.subr.bf16.mxu0 0
    %1928 = vmatpush1.bf16.msra.mxu0 %v1903
    %1929 = vmatprep.subr.bf16.mxu0 0
    %1930 = vmatpush1.bf16.msra.mxu0 %v1902
    %1931 = vmatprep.subr.bf16.mxu0 0
    %1932 = vmatpush1.bf16.msra.mxu0 %v1901
    %1933 = vmatprep.subr.bf16.mxu0 0
    %1934 = vmatpush2.bf16.msra.mxu0 0
    %1935 = vmatprep.subr.bf16.mxu0 0
    %1936 = vmatpush2.bf16.msra.mxu0 0
    %1937 = vmatprep.subr.bf16.mxu0 0
    %1938 = vmatpush2.bf16.msra.mxu0 0
    %1939 = vmatprep.subr.bf16.mxu0 0
    %1940 = vmatpush2.bf16.msra.mxu0 0
    %1941 = vmatprep.subr.bf16.mxu0 0
    %1942 = vmatpush2.bf16.msra.mxu0 0
    %1943 = vmatprep.subr.bf16.mxu0 0
    %1944 = vmatpush2.bf16.msra.mxu0 0
    %1945 = vmatprep.subr.bf16.mxu0 0
    %1946 = vmatpush2.bf16.msra.mxu0 0
    %1947 = vmatprep.subr.bf16.mxu0 0
    %1948 = vmatpush2.bf16.msra.mxu0 0
    %1949 = vmatprep.mubr.bf16.mxu0 0
    %1950 = vmatmul.mubr.bf16.gmra.mxu0 %v1814
    %v1951 = vpop.f32.mrf.mxu0
    %v1952 = vadd.f32 %v1867, %v1951
    %v1953 = vpop.f32.mrf.mxu0
    %v1954 = vpop.f32.mrf.mxu0
    %v1955 = vadd.f32 %v1867, %v1954
    %v1956 = vpop.f32.mrf.mxu0
    %1957 = vmatprep.mubr.bf16.mxu0 0
    %1958 = vmatmul.mubr.bf16.gmra.mxu0 %v1815
    %v1959 = vpop.f32.mrf.mxu0
    %v1960 = vadd.f32 %v1867, %v1959
    %v1961 = vpop.f32.mrf.mxu0
    %v1962 = vpop.f32.mrf.mxu0
    %v1963 = vadd.f32 %v1867, %v1962
    %v1964 = vpop.f32.mrf.mxu0
    %1965 = vmatprep.mubr.bf16.mxu0 0
    %1966 = vmatmul.mubr.bf16.gmra.mxu0 %v1816
    %v1967 = vpop.f32.mrf.mxu0
    %v1968 = vadd.f32 %v1867, %v1967
    %v1969 = vpop.f32.mrf.mxu0
    %v1970 = vpop.f32.mrf.mxu0
    %v1971 = vadd.f32 %v1867, %v1970
    %v1972 = vpop.f32.mrf.mxu0
    %1973 = vmatprep.mubr.bf16.mxu0 0
    %1974 = vmatmul.mubr.bf16.gmra.mxu0 %v1817
    %v1975 = vpop.f32.mrf.mxu0
    %v1976 = vadd.f32 %v1867, %v1975
    %v1977 = vpop.f32.mrf.mxu0
    %v1978 = vpop.f32.mrf.mxu0
    %v1979 = vadd.f32 %v1867, %v1978
    %v1980 = vpop.f32.mrf.mxu0
    %1981 = vmatprep.mubr.bf16.mxu0 0
    %1982 = vmatmul.mubr.bf16.gmra.mxu0 %v1818
    %v1983 = vpop.f32.mrf.mxu0
    %v1984 = vadd.f32 %v1867, %v1983
    %v1985 = vpop.f32.mrf.mxu0
    %v1986 = vpop.f32.mrf.mxu0
    %v1987 = vadd.f32 %v1867, %v1986
    %v1988 = vpop.f32.mrf.mxu0
    %1989 = vmatprep.mubr.bf16.mxu0 0
    %1990 = vmatmul.mubr.bf16.gmra.mxu0 %v1819
    %v1991 = vpop.f32.mrf.mxu0
    %v1992 = vadd.f32 %v1867, %v1991
    %v1993 = vpop.f32.mrf.mxu0
    %v1994 = vpop.f32.mrf.mxu0
    %v1995 = vadd.f32 %v1867, %v1994
    %v1996 = vpop.f32.mrf.mxu0
    %1997 = vmatprep.mubr.bf16.mxu0 0
    %1998 = vmatmul.mubr.bf16.gmra.mxu0 %v1820
    %v1999 = vpop.f32.mrf.mxu0
    %v2000 = vadd.f32 %v1867, %v1999
    %v2001 = vpop.f32.mrf.mxu0
    %v2002 = vpop.f32.mrf.mxu0
    %v2003 = vadd.f32 %v1867, %v2002
    %v2004 = vpop.f32.mrf.mxu0
    %2005 = vmatprep.mubr.bf16.mxu0 0
    %2006 = vmatmul.mubr.bf16.gmra.mxu0 %v1821
    %v2007 = vpop.f32.mrf.mxu0
    %v2008 = vadd.f32 %v1867, %v2007
    %v2009 = vpop.f32.mrf.mxu0
    %v2010 = vpop.f32.mrf.mxu0
    %v2011 = vadd.f32 %v1867, %v2010
    %v2012 = vpop.f32.mrf.mxu0
    %2013 = vmatprep.mubr.bf16.mxu0 0
    %2014 = vmatmul.mubr.bf16.gmra.mxu0 %v1822
    %v2015 = vpop.f32.mrf.mxu0
    %v2016 = vadd.f32 %v1867, %v2015
    %v2017 = vpop.f32.mrf.mxu0
    %v2018 = vpop.f32.mrf.mxu0
    %v2019 = vadd.f32 %v1867, %v2018
    %v2020 = vpop.f32.mrf.mxu0
    %2021 = vmatprep.mubr.bf16.mxu0 0
    %2022 = vmatmul.mubr.bf16.gmra.mxu0 %v1823
    %v2023 = vpop.f32.mrf.mxu0
    %v2024 = vadd.f32 %v1867, %v2023
    %v2025 = vpop.f32.mrf.mxu0
    %v2026 = vpop.f32.mrf.mxu0
    %v2027 = vadd.f32 %v1867, %v2026
    %v2028 = vpop.f32.mrf.mxu0
    %2029 = vmatprep.mubr.bf16.mxu0 0
    %2030 = vmatmul.mubr.bf16.gmra.mxu0 %v1824
    %v2031 = vpop.f32.mrf.mxu0
    %v2032 = vadd.f32 %v1867, %v2031
    %v2033 = vpop.f32.mrf.mxu0
    %v2034 = vpop.f32.mrf.mxu0
    %v2035 = vadd.f32 %v1867, %v2034
    %v2036 = vpop.f32.mrf.mxu0
    %2037 = vmatprep.mubr.bf16.mxu0 0
    %2038 = vmatmul.mubr.bf16.gmra.mxu0 %v1825
    %v2039 = vpop.f32.mrf.mxu0
    %v2040 = vadd.f32 %v1867, %v2039
    %v2041 = vpop.f32.mrf.mxu0
    %v2042 = vpop.f32.mrf.mxu0
    %v2043 = vadd.f32 %v1867, %v2042
    %v2044 = vpop.f32.mrf.mxu0
    %2045 = vmatprep.mubr.bf16.mxu0 0
    %2046 = vmatmul.mubr.bf16.gmra.mxu0 %v1826
    %v2047 = vpop.f32.mrf.mxu0
    %v2048 = vadd.f32 %v1867, %v2047
    %v2049 = vpop.f32.mrf.mxu0
    %v2050 = vpop.f32.mrf.mxu0
    %v2051 = vadd.f32 %v1867, %v2050
    %v2052 = vpop.f32.mrf.mxu0
    %2053 = vmatprep.mubr.bf16.mxu0 0
    %2054 = vmatmul.mubr.bf16.gmra.mxu0 %v1827
    %v2055 = vpop.f32.mrf.mxu0
    %v2056 = vadd.f32 %v1867, %v2055
    %v2057 = vpop.f32.mrf.mxu0
    %v2058 = vpop.f32.mrf.mxu0
    %v2059 = vadd.f32 %v1867, %v2058
    %v2060 = vpop.f32.mrf.mxu0
    %2061 = vmatprep.mubr.bf16.mxu0 0
    %2062 = vmatmul.mubr.bf16.gmra.mxu0 %v1828
    %v2063 = vpop.f32.mrf.mxu0
    %v2064 = vadd.f32 %v1867, %v2063
    %v2065 = vpop.f32.mrf.mxu0
    %v2066 = vpop.f32.mrf.mxu0
    %v2067 = vadd.f32 %v1867, %v2066
    %v2068 = vpop.f32.mrf.mxu0
    %2069 = vmatprep.mubr.bf16.mxu0 0
    %2070 = vmatmul.mubr.bf16.gmra.mxu0 %v1829
    %v2071 = vpop.f32.mrf.mxu0
    %v2072 = vadd.f32 %v1867, %v2071
    %v2073 = vpop.f32.mrf.mxu0
    %v2074 = vpop.f32.mrf.mxu0
    %v2075 = vadd.f32 %v1867, %v2074
    %v2076 = vpop.f32.mrf.mxu0
    %2077 = vmatprep.mubr.bf16.mxu0 0
    %2078 = vmatmul.mubr.bf16.gmra.mxu0 %v1830
    %v2079 = vpop.f32.mrf.mxu0
    %v2080 = vadd.f32 %v1867, %v2079
    %v2081 = vpop.f32.mrf.mxu0
    %v2082 = vpop.f32.mrf.mxu0
    %v2083 = vadd.f32 %v1867, %v2082
    %v2084 = vpop.f32.mrf.mxu0
    %2085 = vmatprep.mubr.bf16.mxu0 0
    %2086 = vmatmul.mubr.bf16.gmra.mxu0 %v1831
    %v2087 = vpop.f32.mrf.mxu0
    %v2088 = vadd.f32 %v1867, %v2087
    %v2089 = vpop.f32.mrf.mxu0
    %v2090 = vpop.f32.mrf.mxu0
    %v2091 = vadd.f32 %v1867, %v2090
    %v2092 = vpop.f32.mrf.mxu0
    %2093 = vmatprep.mubr.bf16.mxu0 0
    %2094 = vmatmul.mubr.bf16.gmra.mxu0 %v1832
    %v2095 = vpop.f32.mrf.mxu0
    %v2096 = vadd.f32 %v1867, %v2095
    %v2097 = vpop.f32.mrf.mxu0
    %v2098 = vpop.f32.mrf.mxu0
    %v2099 = vadd.f32 %v1867, %v2098
    %v2100 = vpop.f32.mrf.mxu0
    %2101 = vmatprep.mubr.bf16.mxu0 0
    %2102 = vmatmul.mubr.bf16.gmra.mxu0 %v1833
    %v2103 = vpop.f32.mrf.mxu0
    %v2104 = vadd.f32 %v1867, %v2103
    %v2105 = vpop.f32.mrf.mxu0
    %v2106 = vpop.f32.mrf.mxu0
    %v2107 = vadd.f32 %v1867, %v2106
    %v2108 = vpop.f32.mrf.mxu0
    %2109 = vmatprep.mubr.bf16.mxu0 0
    %2110 = vmatmul.mubr.bf16.gmra.mxu0 %v1834
    %v2111 = vpop.f32.mrf.mxu0
    %v2112 = vadd.f32 %v1867, %v2111
    %v2113 = vpop.f32.mrf.mxu0
    %v2114 = vpop.f32.mrf.mxu0
    %v2115 = vadd.f32 %v1867, %v2114
    %v2116 = vpop.f32.mrf.mxu0
    %2117 = vmatprep.mubr.bf16.mxu0 0
    %2118 = vmatmul.mubr.bf16.gmra.mxu0 %v1835
    %v2119 = vpop.f32.mrf.mxu0
    %v2120 = vadd.f32 %v1867, %v2119
    %v2121 = vpop.f32.mrf.mxu0
    %v2122 = vpop.f32.mrf.mxu0
    %v2123 = vadd.f32 %v1867, %v2122
    %v2124 = vpop.f32.mrf.mxu0
    %2125 = vmatprep.mubr.bf16.mxu0 0
    %2126 = vmatmul.mubr.bf16.gmra.mxu0 %v1836
    %v2127 = vpop.f32.mrf.mxu0
    %v2128 = vadd.f32 %v1867, %v2127
    %v2129 = vpop.f32.mrf.mxu0
    %v2130 = vpop.f32.mrf.mxu0
    %v2131 = vadd.f32 %v1867, %v2130
    %v2132 = vpop.f32.mrf.mxu0
    %2133 = vmatprep.mubr.bf16.mxu0 0
    %2134 = vmatmul.mubr.bf16.gmra.mxu0 %v1837
    %v2135 = vpop.f32.mrf.mxu0
    %v2136 = vadd.f32 %v1867, %v2135
    %v2137 = vpop.f32.mrf.mxu0
    %v2138 = vpop.f32.mrf.mxu0
    %v2139 = vadd.f32 %v1867, %v2138
    %v2140 = vpop.f32.mrf.mxu0
    %2141 = vmatprep.mubr.bf16.mxu0 0
    %2142 = vmatmul.mubr.bf16.gmra.mxu0 %v1838
    %v2143 = vpop.f32.mrf.mxu0
    %v2144 = vadd.f32 %v1867, %v2143
    %v2145 = vpop.f32.mrf.mxu0
    %v2146 = vpop.f32.mrf.mxu0
    %v2147 = vadd.f32 %v1867, %v2146
    %v2148 = vpop.f32.mrf.mxu0
    %2149 = vmatprep.mubr.bf16.mxu0 0
    %2150 = vmatmul.mubr.bf16.gmra.mxu0 %v1839
    %v2151 = vpop.f32.mrf.mxu0
    %v2152 = vadd.f32 %v1867, %v2151
    %v2153 = vpop.f32.mrf.mxu0
    %v2154 = vpop.f32.mrf.mxu0
    %v2155 = vadd.f32 %v1867, %v2154
    %v2156 = vpop.f32.mrf.mxu0
    %2157 = vmatprep.mubr.bf16.mxu0 0
    %2158 = vmatmul.mubr.bf16.gmra.mxu0 %v1840
    %v2159 = vpop.f32.mrf.mxu0
    %v2160 = vadd.f32 %v1867, %v2159
    %v2161 = vpop.f32.mrf.mxu0
    %v2162 = vpop.f32.mrf.mxu0
    %v2163 = vadd.f32 %v1867, %v2162
    %v2164 = vpop.f32.mrf.mxu0
    %2165 = vmatprep.mubr.bf16.mxu0 0
    %2166 = vmatmul.mubr.bf16.gmra.mxu0 %v1841
    %v2167 = vpop.f32.mrf.mxu0
    %v2168 = vadd.f32 %v1867, %v2167
    %v2169 = vpop.f32.mrf.mxu0
    %v2170 = vpop.f32.mrf.mxu0
    %v2171 = vadd.f32 %v1867, %v2170
    %v2172 = vpop.f32.mrf.mxu0
    %2173 = vmatprep.mubr.bf16.mxu0 0
    %2174 = vmatmul.mubr.bf16.gmra.mxu0 %v1842
    %v2175 = vpop.f32.mrf.mxu0
    %v2176 = vadd.f32 %v1867, %v2175
    %v2177 = vpop.f32.mrf.mxu0
    %v2178 = vpop.f32.mrf.mxu0
    %v2179 = vadd.f32 %v1867, %v2178
    %v2180 = vpop.f32.mrf.mxu0
    %2181 = vmatprep.mubr.bf16.mxu0 0
    %2182 = vmatmul.mubr.bf16.gmra.mxu0 %v1843
    %v2183 = vpop.f32.mrf.mxu0
    %v2184 = vadd.f32 %v1867, %v2183
    %v2185 = vpop.f32.mrf.mxu0
    %v2186 = vpop.f32.mrf.mxu0
    %v2187 = vadd.f32 %v1867, %v2186
    %v2188 = vpop.f32.mrf.mxu0
    %2189 = vmatprep.mubr.bf16.mxu0 0
    %2190 = vmatmul.mubr.bf16.gmra.mxu0 %v1844
    %v2191 = vpop.f32.mrf.mxu0
    %v2192 = vadd.f32 %v1867, %v2191
    %v2193 = vpop.f32.mrf.mxu0
    %v2194 = vpop.f32.mrf.mxu0
    %v2195 = vadd.f32 %v1867, %v2194
    %v2196 = vpop.f32.mrf.mxu0
    %2197 = vmatprep.mubr.bf16.mxu0 0
    %2198 = vmatmul.mubr.bf16.gmra.mxu0 %v1845
    %v2199 = vpop.f32.mrf.mxu0
    %v2200 = vadd.f32 %v1867, %v2199
    %v2201 = vpop.f32.mrf.mxu0
    %v2202 = vpop.f32.mrf.mxu0
    %v2203 = vadd.f32 %v1867, %v2202
    %v2204 = vpop.f32.mrf.mxu0
    %2205 = vdwg.mxu0
    %2206 = vst [vmem:[#allocation2] sm:$0xff] %v1952
    %2207 = vst [vmem:[#allocation2 + $0x8] sm:$0xff] %v1955
    %2208 = vst [vmem:[#allocation2 + $0x10] sm:$0xff] %v1960
    %2209 = vst [vmem:[#allocation2 + $0x18] sm:$0xff] %v1963
    %2210 = vst [vmem:[#allocation2 + $0x20] sm:$0xff] %v1968
    %2211 = vst [vmem:[#allocation2 + $0x28] sm:$0xff] %v1971
    %2212 = vst [vmem:[#allocation2 + $0x30] sm:$0xff] %v1976
    %2213 = vst [vmem:[#allocation2 + $0x38] sm:$0xff] %v1979
    %2214 = vst [vmem:[#allocation2 + $0x40] sm:$0xff] %v1984
    %2215 = vst [vmem:[#allocation2 + $0x48] sm:$0xff] %v1987
    %2216 = vst [vmem:[#allocation2 + $0x50] sm:$0xff] %v1992
    %2217 = vst [vmem:[#allocation2 + $0x58] sm:$0xff] %v1995
    %2218 = vst [vmem:[#allocation2 + $0x60] sm:$0xff] %v2000
    %2219 = vst [vmem:[#allocation2 + $0x68] sm:$0xff] %v2003
    %2220 = vst [vmem:[#allocation2 + $0x70] sm:$0xff] %v2008
    %2221 = vst [vmem:[#allocation2 + $0x78] sm:$0xff] %v2011
    %2222 = vst [vmem:[#allocation2 + $0x80] sm:$0xff] %v2016
    %2223 = vst [vmem:[#allocation2 + $0x88] sm:$0xff] %v2019
    %2224 = vst [vmem:[#allocation2 + $0x90] sm:$0xff] %v2024
    %2225 = vst [vmem:[#allocation2 + $0x98] sm:$0xff] %v2027
    %2226 = vst [vmem:[#allocation2 + $0xa0] sm:$0xff] %v2032
    %2227 = vst [vmem:[#allocation2 + $0xa8] sm:$0xff] %v2035
    %2228 = vst [vmem:[#allocation2 + $0xb0] sm:$0xff] %v2040
    %2229 = vst [vmem:[#allocation2 + $0xb8] sm:$0xff] %v2043
    %2230 = vst [vmem:[#allocation2 + $0xc0] sm:$0xff] %v2048
    %2231 = vst [vmem:[#allocation2 + $0xc8] sm:$0xff] %v2051
    %2232 = vst [vmem:[#allocation2 + $0xd0] sm:$0xff] %v2056
    %2233 = vst [vmem:[#allocation2 + $0xd8] sm:$0xff] %v2059
    %2234 = vst [vmem:[#allocation2 + $0xe0] sm:$0xff] %v2064
    %2235 = vst [vmem:[#allocation2 + $0xe8] sm:$0xff] %v2067
    %2236 = vst [vmem:[#allocation2 + $0xf0] sm:$0xff] %v2072
    %2237 = vst [vmem:[#allocation2 + $0xf8] sm:$0xff] %v2075
    %2238 = vst [vmem:[#allocation2 + $0x100] sm:$0xff] %v2080
    %2239 = vst [vmem:[#allocation2 + $0x108] sm:$0xff] %v2083
    %2240 = vst [vmem:[#allocation2 + $0x110] sm:$0xff] %v2088
    %2241 = vst [vmem:[#allocation2 + $0x118] sm:$0xff] %v2091
    %2242 = vst [vmem:[#allocation2 + $0x120] sm:$0xff] %v2096
    %2243 = vst [vmem:[#allocation2 + $0x128] sm:$0xff] %v2099
    %2244 = vst [vmem:[#allocation2 + $0x130] sm:$0xff] %v2104
    %2245 = vst [vmem:[#allocation2 + $0x138] sm:$0xff] %v2107
    %2246 = vst [vmem:[#allocation2 + $0x140] sm:$0xff] %v2112
    %2247 = vst [vmem:[#allocation2 + $0x148] sm:$0xff] %v2115
    %2248 = vst [vmem:[#allocation2 + $0x150] sm:$0xff] %v2120
    %2249 = vst [vmem:[#allocation2 + $0x158] sm:$0xff] %v2123
    %2250 = vst [vmem:[#allocation2 + $0x160] sm:$0xff] %v2128
    %2251 = vst [vmem:[#allocation2 + $0x168] sm:$0xff] %v2131
    %2252 = vst [vmem:[#allocation2 + $0x170] sm:$0xff] %v2136
    %2253 = vst [vmem:[#allocation2 + $0x178] sm:$0xff] %v2139
    %2254 = vst [vmem:[#allocation2 + $0x180] sm:$0xff] %v2144
    %2255 = vst [vmem:[#allocation2 + $0x188] sm:$0xff] %v2147
    %2256 = vst [vmem:[#allocation2 + $0x190] sm:$0xff] %v2152
    %2257 = vst [vmem:[#allocation2 + $0x198] sm:$0xff] %v2155
    %2258 = vst [vmem:[#allocation2 + $0x1a0] sm:$0xff] %v2160
    %2259 = vst [vmem:[#allocation2 + $0x1a8] sm:$0xff] %v2163
    %2260 = vst [vmem:[#allocation2 + $0x1b0] sm:$0xff] %v2168
    %2261 = vst [vmem:[#allocation2 + $0x1b8] sm:$0xff] %v2171
    %2262 = vst [vmem:[#allocation2 + $0x1c0] sm:$0xff] %v2176
    %2263 = vst [vmem:[#allocation2 + $0x1c8] sm:$0xff] %v2179
    %2264 = vst [vmem:[#allocation2 + $0x1d0] sm:$0xff] %v2184
    %2265 = vst [vmem:[#allocation2 + $0x1d8] sm:$0xff] %v2187
    %2266 = vst [vmem:[#allocation2 + $0x1e0] sm:$0xff] %v2192
    %2267 = vst [vmem:[#allocation2 + $0x1e8] sm:$0xff] %v2195
    %2268 = vst [vmem:[#allocation2 + $0x1f0] sm:$0xff] %v2200
    %2269 = vst [vmem:[#allocation2 + $0x1f8] sm:$0xff] %v2203
    // Predicated region
    $region34: #{dcs_linear_self_attention.1} parent=1 // pred_check
      _
    $region35: #{dcs_linear_self_attention.1} parent=1 // pred_check_branch
      %2271 = sbr.rel (0) target = $region37
    $region36: #{dcs_linear_self_attention.1} parent=1 // pred_region
      %s2273 = ssub.s32 8192, 8192
      %2274 = vsyncadd [#allocation3], %s2273
      %s2275 = sshll.u32 [#allocation2], 4
      %s2276 = int_to_ptr.vmem [resolvable:$true] %s2275
      %2281 = dma.vmem_to_hbm [thread:$0]  %s2276, 8192, %s8, [#allocation3], 128, 128, 8
    $region37: #{dcs_linear_self_attention.1} parent=1 // pred_fallthru
      _
    // Predicated region
    $region38: #{dcs_linear_self_attention.1} parent=1 // pred_check
      _
    $region39: #{dcs_linear_self_attention.1} parent=1 // pred_check_branch
      %2283 = sbr.rel (0) target = $region41
    $region40: #{dcs_linear_self_attention.1} parent=1 // pred_region
      %2284 = dma.done [#allocation3], 8192
    $region41: #{dcs_linear_self_attention.1} parent=1 // pred_fallthru
      _
    %2285 = vsyncpa [#allocation3], 1

</llo_original>
